<compile_context>
chip_gen: v6e
topology: v6e:2x2x1
jax: 0.10.0
libtpu: 0.0.40
codegen_flags: <defaults>
</compile_context>

<pallas_src>
import functools

import jax
import jax.numpy as jnp
import numpy as np
from jax import lax
from jax.experimental import pallas as pl
from jax.experimental.pallas import tpu as pltpu


# ----------------------------------------------------------------------------
# Pallas kernel: one batch tile (Bblk examples, M = Bblk*T rows) per grid step
# ----------------------------------------------------------------------------
def _make_kernel(Bblk, T, C, cdt):
    M = Bblk * T

    def shifted_taps(v):
        # v: (M, width) = Bblk examples x T time steps (channels-last).
        # Returns (v[t-1], v[t+1]) per example with zeros at each example's
        # time edges (== the k=3 conv zero padding).  roll is XLU; the mask
        # (one 2-D iota + two compares + selects) is cheap VPU work.
        t = lax.broadcasted_iota(jnp.int32, v.shape, 0) % T
        zero = jnp.zeros_like(v)
        prev = jnp.where(t == 0, zero, pltpu.roll(v, 1, 0))        # v[t-1]
        nxt = jnp.where(t == T - 1, zero, pltpu.roll(v, M - 1, 0))  # v[t+1]
        return prev, nxt

    def kernel(x_ref, w1_ref, wup_ref, sc1_ref, sh1_ref, scu_ref, shu_ref,
               w2_ref, s2_ref, b2_ref, wse1_ref, wse2_ref, asq_ref, aex_ref,
               out_ref):
        x = x_ref[...]                                         # (M, Cin), cdt
        xp, xn = shifted_taps(x)

        # ---- conv1 (k=3, SubPixelConv1d @ stride=1): 3 accumulating matmuls
        y = jnp.dot(xp, w1_ref[0], preferred_element_type=jnp.float32)
        y = y + jnp.dot(x, w1_ref[1], preferred_element_type=jnp.float32)
        y = y + jnp.dot(xn, w1_ref[2], preferred_element_type=jnp.float32)
        y1 = jnp.clip(y * sc1_ref[...] + sh1_ref[...], 0.0, 6.0)  # BN1 + relu6

        # ---- upsample branch: 1x1 conv + BN (Interpolate(scale=1) == id)
        res = jnp.dot(x, wup_ref[...], preferred_element_type=jnp.float32)
        res = res * scu_ref[...] + shu_ref[...]

        # ---- conv2 (k=3) + BN2
        y1c = y1.astype(cdt)                                   # cast once
        yp, yn = shifted_taps(y1c)
        y2 = jnp.dot(yp, w2_ref[0], preferred_element_type=jnp.float32)
        y2 = y2 + jnp.dot(y1c, w2_ref[1], preferred_element_type=jnp.float32)
        y2 = y2 + jnp.dot(yn, w2_ref[2], preferred_element_type=jnp.float32)
        y2 = y2 * s2_ref[...] + b2_ref[...]

        # ---- SE block: squeeze + broadcast back on the (idle) MXU
        z = jnp.dot(asq_ref[...], y2,
                    preferred_element_type=jnp.float32)        # (Bblk, C)
        h = jnp.clip(jnp.dot(z, wse1_ref[...],
                             preferred_element_type=jnp.float32), 0.0, 6.0)
        s = jax.nn.sigmoid(jnp.dot(h, wse2_ref[...],
                                   preferred_element_type=jnp.float32))
        s_full = jnp.dot(aex_ref[...], s,
                         preferred_element_type=jnp.float32)   # (M, C)

        # ---- SE scale + residual add + final relu6: one full-tile store
        out_ref[...] = jnp.clip(y2 * s_full + res, 0.0, 6.0).astype(out_ref.dtype)

    return kernel


# ----------------------------------------------------------------------------
# Batch-tile auto sizing: big M, grid >= 2, VMEM-budgeted, sublane-aligned
# ----------------------------------------------------------------------------
def _pick_batch_block(B, T, Cin, C, act_bytes, vmem_budget=32 * 1024 * 1024):
    def est(d):
        m = d * T
        io = 2 * m * Cin * act_bytes + 2 * m * C * 4       # double-buffered I/O
        temps = 10 * m * max(Cin, C) * 4                   # rough live f32 temps
        return io + temps

    divs = [d for d in range(1, B + 1) if B % d == 0]
    ok = [d for d in divs if (d * T) % 8 == 0 or d == B]   # (8,*) sublane rule
    fit = [d for d in ok if d * T <= 1024 and est(d) <= vmem_budget]
    pref = [d for d in fit if B // d >= 2]                 # keep both v7x TCs busy
    if pref:
        return max(pref)
    if fit:
        return max(fit)
    return min(ok)


# ----------------------------------------------------------------------------
# Channels-last entry point: x2d is (B*T, Cin); output is (B*T, C)
# ----------------------------------------------------------------------------
def se_resnet1d_dec_block_nlc2d(x2d, kp, *, B, T, batch_block=None,
                                use_bf16=True, out_dtype=jnp.float32):
    BT, Cin = x2d.shape
    assert BT == B * T
    C = kp["s2"].shape[1]
    Cb = kp["wse1"].shape[1]

    cdt = jnp.bfloat16 if use_bf16 else jnp.float32
    act_bytes = 2 if use_bf16 else 4

    if batch_block is None:
        batch_block = _pick_batch_block(B, T, Cin, C, act_bytes)
    Bblk = batch_block
    assert B % Bblk == 0
    M = Bblk * T
    assert (M % 8 == 0) or (Bblk == B), (
        "batch_block*T must be a multiple of 8 (sublane tile) or cover the "
        "whole batch")

    x2d = x2d.astype(cdt)
    w1 = kp["w1"].astype(cdt)
    wup = kp["wup"].astype(cdt)
    w2 = kp["w2"].astype(cdt)

    # Constant block-diagonal matrices: SE squeeze (mean over time) and
    # broadcast-back of the SE scale; both consumed by the MXU in-kernel.
    eye = jnp.eye(Bblk, dtype=jnp.float32)
    asq = jnp.repeat(eye, T, axis=1) / float(T)            # (Bblk, M)
    aex = jnp.repeat(eye, T, axis=0)                       # (M, Bblk)

    return pl.pallas_call(
        _make_kernel(Bblk, T, C, cdt),
        out_shape=jax.ShapeDtypeStruct((B * T, C), out_dtype),
        grid=(B // Bblk,),
        in_specs=[
            pl.BlockSpec((M, Cin), lambda g: (g, 0)),            # x batch tile
            pl.BlockSpec((3, Cin, C), lambda g: (0, 0, 0)),      # conv1 taps
            pl.BlockSpec((Cin, C), lambda g: (0, 0)),            # upsample 1x1
            pl.BlockSpec((1, C), lambda g: (0, 0)),              # bn1 scale
            pl.BlockSpec((1, C), lambda g: (0, 0)),              # bn1 shift
            pl.BlockSpec((1, C), lambda g: (0, 0)),              # bn_up scale
            pl.BlockSpec((1, C), lambda g: (0, 0)),              # bn_up shift
            pl.BlockSpec((3, C, C), lambda g: (0, 0, 0)),        # conv2 taps
            pl.BlockSpec((1, C), lambda g: (0, 0)),              # bn2 scale
            pl.BlockSpec((1, C), lambda g: (0, 0)),              # bn2 shift
            pl.BlockSpec((C, Cb), lambda g: (0, 0)),             # SE W1
            pl.BlockSpec((Cb, C), lambda g: (0, 0)),             # SE W2
            pl.BlockSpec((Bblk, M), lambda g: (0, 0)),           # SE squeeze mat
            pl.BlockSpec((M, Bblk), lambda g: (0, 0)),           # SE expand mat
        ],
        out_specs=pl.BlockSpec((M, C), lambda g: (g, 0)),
        compiler_params=pltpu.CompilerParams(
            dimension_semantics=("parallel",),
            vmem_limit_bytes=48 * 1024 * 1024,
        ),
    )(x2d, w1, wup, kp["sc1"], kp["sh1"], kp["scu"], kp["shu"],
      w2, kp["s2"], kp["b2"], kp["wse1"], kp["wse2"], asq, aex)


# ----------------------------------------------------------------------------
# PyTorch-parity wrapper: NCL in, NCL out (layout plumbing only)
# ----------------------------------------------------------------------------
def se_resnet1d_basic_dec_block(x_ncl, kp, *, batch_block=None, use_bf16=True):
    """x_ncl: (B, Cin, T) float32 in PyTorch NCL layout -> (B, C, T)."""
    B, Cin, T = x_ncl.shape
    C = kp["s2"].shape[1]
    x2d = jnp.transpose(x_ncl, (0, 2, 1)).reshape(B * T, Cin)
    out2d = se_resnet1d_dec_block_nlc2d(
        x2d, kp, B=B, T=T, batch_block=batch_block, use_bf16=use_bf16)
    return jnp.transpose(out2d.reshape(B, T, C), (0, 2, 1))


# ----------------------------------------------------------------------------
# Pure-JAX reference (PyTorch semantics, NCL layout) for verification
# ----------------------------------------------------------------------------
def reference_forward(x, tp, eps=1e-5):
    hi = jax.lax.Precision.HIGHEST

    def conv1d(inp, w, pad):
        return jax.lax.conv_general_dilated(
            inp, w, window_strides=(1,), padding=[(pad, pad)],
            dimension_numbers=("NCH", "OIH", "NCH"), precision=hi)

    def bn(inp, g, b, m, v):
        return ((inp - m[None, :, None]) / jnp.sqrt(v[None, :, None] + eps)
                * g[None, :, None] + b[None, :, None])

    relu6 = lambda t: jnp.clip(t, 0.0, 6.0)

    residual = x
    h = conv1d(x, tp["conv1_w"], 1)                  # SubPixelConv1d, stride=1
    h = bn(h, *tp["bn1"])
    h = relu6(h)
    h = conv1d(h, tp["conv2_w"], 1)
    h = bn(h, *tp["bn2"])
    # SE layer
    z = jnp.mean(h, axis=2, keepdims=True)
    zh = relu6(jnp.einsum("oc,bcl->bol", tp["se_w1"][:, :, 0], z, precision=hi))
    sc = jax.nn.sigmoid(jnp.einsum("oc,bcl->bol", tp["se_w2"][:, :, 0], zh,
                                   precision=hi))
    h = h * sc
    # upsample branch (1x1 conv + BN + Interpolate(scale=1) == identity)
    r = conv1d(residual, tp["up_w"], 0)
    r = bn(r, *tp["bn_u"])
    return relu6(h + r)


# ----------------------------------------------------------------------------
# Deterministic parameter construction (torch-style + fused kernel layout)
# ----------------------------------------------------------------------------
def make_params(key, in_channels, channels, se_r, eps=1e-5):
    Cin, C = in_channels, channels
    Cb = max(1, channels // se_r)
    ks = jax.random.split(key, 8)

    def bn_params(k):
        k1, k2, k3, k4 = jax.random.split(k, 4)
        gamma = 1.0 + 0.1 * jax.random.normal(k1, (C,), jnp.float32)
        beta = 0.1 * jax.random.normal(k2, (C,), jnp.float32)
        mean = 0.1 * jax.random.normal(k3, (C,), jnp.float32)
        var = 0.5 + jax.random.uniform(k4, (C,), jnp.float32)
        return gamma, beta, mean, var

    tp = {
        "conv1_w": 0.1 * jax.random.normal(ks[0], (C, Cin, 3), jnp.float32),
        "conv2_w": 0.1 * jax.random.normal(ks[1], (C, C, 3), jnp.float32),
        "se_w1": 0.2 * jax.random.normal(ks[2], (Cb, C, 1), jnp.float32),
        "se_w2": 0.2 * jax.random.normal(ks[3], (C, Cb, 1), jnp.float32),
        "up_w": 0.1 * jax.random.normal(ks[4], (C, Cin, 1), jnp.float32),
        "bn1": bn_params(ks[5]),
        "bn2": bn_params(ks[6]),
        "bn_u": bn_params(ks[7]),
    }

    def fold(bn):
        g, b, m, v = bn
        s = g / jnp.sqrt(v + eps)
        return s, b - m * s

    s1, b1 = fold(tp["bn1"])
    s2, b2 = fold(tp["bn2"])
    su, bu = fold(tp["bn_u"])

    kp = {
        # tap k of the kernel weights multiplies x[t + k - 1]
        "w1": jnp.stack([tp["conv1_w"][:, :, k].T for k in range(3)], 0),  # (3,Cin,C)
        "wup": tp["up_w"][:, :, 0].T,                                      # (Cin,C)
        "w2": jnp.stack([tp["conv2_w"][:, :, k].T for k in range(3)], 0),  # (3,C,C)
        "sc1": s1.reshape(1, C), "sh1": b1.reshape(1, C),
        "scu": su.reshape(1, C), "shu": bu.reshape(1, C),
        "s2": s2.reshape(1, C), "b2": b2.reshape(1, C),
        "wse1": tp["se_w1"][:, :, 0].T,   # (C, Cb)
        "wse2": tp["se_w2"][:, :, 0].T,   # (Cb, C)
    }
    return tp, kp


if __name__ == "__main__":
    B, Cin, C, T, se_r = 4, 16, 32, 16, 16

    key = jax.random.PRNGKey(0)
    kx, kparam = jax.random.split(key)
    x = jax.random.normal(kx, (B, Cin, T), jnp.float32)   # PyTorch NCL input

    torch_params, kernel_params = make_params(kparam, Cin, C, se_r)

    run_f32 = jax.jit(functools.partial(
        se_resnet1d_basic_dec_block, kp=kernel_params, use_bf16=False))
    run_bf16 = jax.jit(functools.partial(
        se_resnet1d_basic_dec_block, kp=kernel_params, use_bf16=True))

    ref = jax.block_until_ready(reference_forward(x, torch_params))

    # f32 path: strict check of the fused algorithm
    out_f32 = jax.block_until_ready(run_f32(x))
    np.testing.assert_allclose(np.asarray(out_f32), np.asarray(ref),
                               rtol=3e-3, atol=3e-3)

    # bf16-MXU path (optimized): bf16 rounding of activations/conv weights
    out = jax.block_until_ready(run_bf16(x))
    np.testing.assert_allclose(np.asarray(out), np.asarray(ref),
                               rtol=5e-2, atol=5e-2)

    assert out.shape == (B, C, T) and out.dtype == jnp.float32
    print("KERNEL_OK")
</pallas_src>

<mosaic_0001>
module attributes {stable_mosaic.version = 11 : i64} {
  func.func @kernel(%arg0: i32, %arg1: memref<32x16xf32, #tpu.memory_space<vmem>>, %arg2: memref<3x16x32xf32, #tpu.memory_space<vmem>>, %arg3: memref<16x32xf32, #tpu.memory_space<vmem>>, %arg4: memref<1x32xf32, #tpu.memory_space<vmem>>, %arg5: memref<1x32xf32, #tpu.memory_space<vmem>>, %arg6: memref<1x32xf32, #tpu.memory_space<vmem>>, %arg7: memref<1x32xf32, #tpu.memory_space<vmem>>, %arg8: memref<3x32x32xf32, #tpu.memory_space<vmem>>, %arg9: memref<1x32xf32, #tpu.memory_space<vmem>>, %arg10: memref<1x32xf32, #tpu.memory_space<vmem>>, %arg11: memref<32x2xf32, #tpu.memory_space<vmem>>, %arg12: memref<2x32xf32, #tpu.memory_space<vmem>>, %arg13: memref<2x32xf32, #tpu.memory_space<vmem>>, %arg14: memref<32x2xf32, #tpu.memory_space<vmem>>, %arg15: memref<32x32xf32, #tpu.memory_space<vmem>>) attributes {dimension_semantics = [#tpu.dimension_semantics<parallel>], iteration_bounds = array<i64: 2>, scalar_prefetch = 0 : i64, scratch_operands = 0 : i64, tpu.core_type = #tpu.core_type<tc>, window_params = [{transform_indices = @transform_0, window_bounds = array<i64: 32, 16>}, {pipeline_mode = #tpu.pipeline_mode<synchronous>, transform_indices = @transform_1, window_bounds = array<i64: 3, 16, 32>}, {pipeline_mode = #tpu.pipeline_mode<synchronous>, transform_indices = @transform_2, window_bounds = array<i64: 16, 32>}, {pipeline_mode = #tpu.pipeline_mode<synchronous>, transform_indices = @transform_3, window_bounds = array<i64: 1, 32>}, {pipeline_mode = #tpu.pipeline_mode<synchronous>, transform_indices = @transform_4, window_bounds = array<i64: 1, 32>}, {pipeline_mode = #tpu.pipeline_mode<synchronous>, transform_indices = @transform_5, window_bounds = array<i64: 1, 32>}, {pipeline_mode = #tpu.pipeline_mode<synchronous>, transform_indices = @transform_6, window_bounds = array<i64: 1, 32>}, {pipeline_mode = #tpu.pipeline_mode<synchronous>, transform_indices = @transform_7, window_bounds = array<i64: 3, 32, 32>}, {pipeline_mode = #tpu.pipeline_mode<synchronous>, transform_indices = @transform_8, window_bounds = array<i64: 1, 32>}, {pipeline_mode = #tpu.pipeline_mode<synchronous>, transform_indices = @transform_9, window_bounds = array<i64: 1, 32>}, {pipeline_mode = #tpu.pipeline_mode<synchronous>, transform_indices = @transform_10, window_bounds = array<i64: 32, 2>}, {pipeline_mode = #tpu.pipeline_mode<synchronous>, transform_indices = @transform_11, window_bounds = array<i64: 2, 32>}, {pipeline_mode = #tpu.pipeline_mode<synchronous>, transform_indices = @transform_12, window_bounds = array<i64: 2, 32>}, {pipeline_mode = #tpu.pipeline_mode<synchronous>, transform_indices = @transform_13, window_bounds = array<i64: 32, 2>}, {transform_indices = @transform_14, window_bounds = array<i64: 32, 32>}]} {
    %c0 = arith.constant 0 : index
    %c0_0 = arith.constant 0 : index
    %0 = vector.load %arg1[%c0, %c0_0] : memref<32x16xf32, #tpu.memory_space<vmem>>, vector<32x16xf32>
    %1 = tpu.iota {dimensions = array<i32: 0>} : vector<32x16xi32>
    %c16_i32 = arith.constant 16 : i32
    %c0_i32 = arith.constant 0 : i32
    %2 = arith.cmpi eq, %c16_i32, %c0_i32 : i32
    %c1_i32 = arith.constant 1 : i32
    %3 = arith.select %2, %c1_i32, %c16_i32 : i32
    %4 = vector.broadcast %3 : i32 to vector<32x16xi32>
    %5 = arith.remsi %1, %4 : vector<32x16xi32>
    %c0_i32_1 = arith.constant 0 : i32
    %6 = vector.broadcast %c0_i32_1 : i32 to vector<32x16xi32>
    %7 = arith.cmpi ne, %5, %6 : vector<32x16xi32>
    %c0_i32_2 = arith.constant 0 : i32
    %8 = vector.broadcast %c0_i32_2 : i32 to vector<32x16xi32>
    %9 = arith.cmpi slt, %5, %8 : vector<32x16xi32>
    %c0_i32_3 = arith.constant 0 : i32
    %10 = arith.cmpi slt, %3, %c0_i32_3 : i32
    %11 = vector.broadcast %10 : i1 to vector<32x16xi1>
    %12 = vector.broadcast %11 : vector<32x16xi1> to vector<32x16xi1>
    %13 = arith.xori %9, %12 : vector<32x16xi1>
    %14 = arith.andi %13, %7 : vector<32x16xi1>
    %15 = vector.broadcast %3 : i32 to vector<32x16xi32>
    %16 = arith.addi %5, %15 : vector<32x16xi32>
    %17 = arith.select %14, %16, %5 : vector<32x16xi1>, vector<32x16xi32>
    %cst = arith.constant 0.000000e+00 : f32
    %18 = vector.broadcast %cst : f32 to vector<32x16xf32>
    %c0_i32_4 = arith.constant 0 : i32
    %19 = vector.broadcast %c0_i32_4 : i32 to vector<32x16xi32>
    %20 = arith.cmpi eq, %17, %19 : vector<32x16xi32>
    %c1_i32_5 = arith.constant 1 : i32
    %21 = tpu.dynamic_rotate %0 by %c1_i32_5 dim 0 : vector<32x16xf32>, i32 -> vector<32x16xf32>
    %22 = arith.select %20, %18, %21 : vector<32x16xi1>, vector<32x16xf32>
    %c15_i32 = arith.constant 15 : i32
    %23 = vector.broadcast %c15_i32 : i32 to vector<32x16xi32>
    %24 = arith.cmpi eq, %17, %23 : vector<32x16xi32>
    %c31_i32 = arith.constant 31 : i32
    %25 = tpu.dynamic_rotate %0 by %c31_i32 dim 0 : vector<32x16xf32>, i32 -> vector<32x16xf32>
    %26 = arith.select %24, %18, %25 : vector<32x16xi1>, vector<32x16xf32>
    %c0_6 = arith.constant 0 : index
    %c0_7 = arith.constant 0 : index
    %c0_8 = arith.constant 0 : index
    %27 = vector.load %arg2[%c0_6, %c0_7, %c0_8] : memref<3x16x32xf32, #tpu.memory_space<vmem>>, vector<1x16x32xf32>
    %28 = vector.shape_cast %27 : vector<1x16x32xf32> to vector<16x32xf32>
    %cst_9 = arith.constant dense<0.000000e+00> : vector<32x32xf32>
    %29 = tpu.matmul %22, %28, %cst_9 {dimension_numbers = #tpu.dot_dimension_numbers<[1], [0], [0], [1], [0, 0, 1, 1], [], []>} : vector<32x16xf32>, vector<16x32xf32>, vector<32x32xf32> -> vector<32x32xf32>
    %c1 = arith.constant 1 : index
    %c0_10 = arith.constant 0 : index
    %c0_11 = arith.constant 0 : index
    %30 = vector.load %arg2[%c1, %c0_10, %c0_11] : memref<3x16x32xf32, #tpu.memory_space<vmem>>, vector<1x16x32xf32>
    %31 = vector.shape_cast %30 : vector<1x16x32xf32> to vector<16x32xf32>
    %cst_12 = arith.constant dense<0.000000e+00> : vector<32x32xf32>
    %32 = tpu.matmul %0, %31, %cst_12 {dimension_numbers = #tpu.dot_dimension_numbers<[1], [0], [0], [1], [0, 0, 1, 1], [], []>} : vector<32x16xf32>, vector<16x32xf32>, vector<32x32xf32> -> vector<32x32xf32>
    %33 = arith.addf %29, %32 : vector<32x32xf32>
    %c2 = arith.constant 2 : index
    %c0_13 = arith.constant 0 : index
    %c0_14 = arith.constant 0 : index
    %34 = vector.load %arg2[%c2, %c0_13, %c0_14] : memref<3x16x32xf32, #tpu.memory_space<vmem>>, vector<1x16x32xf32>
    %35 = vector.shape_cast %34 : vector<1x16x32xf32> to vector<16x32xf32>
    %cst_15 = arith.constant dense<0.000000e+00> : vector<32x32xf32>
    %36 = tpu.matmul %26, %35, %cst_15 {dimension_numbers = #tpu.dot_dimension_numbers<[1], [0], [0], [1], [0, 0, 1, 1], [], []>} : vector<32x16xf32>, vector<16x32xf32>, vector<32x32xf32> -> vector<32x32xf32>
    %37 = arith.addf %33, %36 : vector<32x32xf32>
    %c0_16 = arith.constant 0 : index
    %c0_17 = arith.constant 0 : index
    %38 = vector.load %arg4[%c0_16, %c0_17] : memref<1x32xf32, #tpu.memory_space<vmem>>, vector<1x32xf32>
    %39 = vector.broadcast %38 : vector<1x32xf32> to vector<32x32xf32>
    %40 = arith.mulf %37, %39 : vector<32x32xf32>
    %c0_18 = arith.constant 0 : index
    %c0_19 = arith.constant 0 : index
    %41 = vector.load %arg5[%c0_18, %c0_19] : memref<1x32xf32, #tpu.memory_space<vmem>>, vector<1x32xf32>
    %42 = vector.broadcast %41 : vector<1x32xf32> to vector<32x32xf32>
    %43 = arith.addf %40, %42 : vector<32x32xf32>
    %cst_20 = arith.constant 0.000000e+00 : f32
    %cst_21 = arith.constant 6.000000e+00 : f32
    %44 = vector.broadcast %cst_20 : f32 to vector<32x32xf32>
    %45 = arith.maximumf %44, %43 : vector<32x32xf32>
    %46 = vector.broadcast %cst_21 : f32 to vector<32x32xf32>
    %47 = arith.minimumf %46, %45 : vector<32x32xf32>
    %c0_22 = arith.constant 0 : index
    %c0_23 = arith.constant 0 : index
    %48 = vector.load %arg3[%c0_22, %c0_23] : memref<16x32xf32, #tpu.memory_space<vmem>>, vector<16x32xf32>
    %cst_24 = arith.constant dense<0.000000e+00> : vector<32x32xf32>
    %49 = tpu.matmul %0, %48, %cst_24 {dimension_numbers = #tpu.dot_dimension_numbers<[1], [0], [0], [1], [0, 0, 1, 1], [], []>} : vector<32x16xf32>, vector<16x32xf32>, vector<32x32xf32> -> vector<32x32xf32>
    %c0_25 = arith.constant 0 : index
    %c0_26 = arith.constant 0 : index
    %50 = vector.load %arg6[%c0_25, %c0_26] : memref<1x32xf32, #tpu.memory_space<vmem>>, vector<1x32xf32>
    %51 = vector.broadcast %50 : vector<1x32xf32> to vector<32x32xf32>
    %52 = arith.mulf %49, %51 : vector<32x32xf32>
    %c0_27 = arith.constant 0 : index
    %c0_28 = arith.constant 0 : index
    %53 = vector.load %arg7[%c0_27, %c0_28] : memref<1x32xf32, #tpu.memory_space<vmem>>, vector<1x32xf32>
    %54 = vector.broadcast %53 : vector<1x32xf32> to vector<32x32xf32>
    %55 = arith.addf %52, %54 : vector<32x32xf32>
    %56 = tpu.iota {dimensions = array<i32: 0>} : vector<32x32xi32>
    %c16_i32_29 = arith.constant 16 : i32
    %c0_i32_30 = arith.constant 0 : i32
    %57 = arith.cmpi eq, %c16_i32_29, %c0_i32_30 : i32
    %c1_i32_31 = arith.constant 1 : i32
    %58 = arith.select %57, %c1_i32_31, %c16_i32_29 : i32
    %59 = vector.broadcast %58 : i32 to vector<32x32xi32>
    %60 = arith.remsi %56, %59 : vector<32x32xi32>
    %c0_i32_32 = arith.constant 0 : i32
    %61 = vector.broadcast %c0_i32_32 : i32 to vector<32x32xi32>
    %62 = arith.cmpi ne, %60, %61 : vector<32x32xi32>
    %c0_i32_33 = arith.constant 0 : i32
    %63 = vector.broadcast %c0_i32_33 : i32 to vector<32x32xi32>
    %64 = arith.cmpi slt, %60, %63 : vector<32x32xi32>
    %c0_i32_34 = arith.constant 0 : i32
    %65 = arith.cmpi slt, %58, %c0_i32_34 : i32
    %66 = vector.broadcast %65 : i1 to vector<32x32xi1>
    %67 = vector.broadcast %66 : vector<32x32xi1> to vector<32x32xi1>
    %68 = arith.xori %64, %67 : vector<32x32xi1>
    %69 = arith.andi %68, %62 : vector<32x32xi1>
    %70 = vector.broadcast %58 : i32 to vector<32x32xi32>
    %71 = arith.addi %60, %70 : vector<32x32xi32>
    %72 = arith.select %69, %71, %60 : vector<32x32xi1>, vector<32x32xi32>
    %cst_35 = arith.constant 0.000000e+00 : f32
    %73 = vector.broadcast %cst_35 : f32 to vector<32x32xf32>
    %c0_i32_36 = arith.constant 0 : i32
    %74 = vector.broadcast %c0_i32_36 : i32 to vector<32x32xi32>
    %75 = arith.cmpi eq, %72, %74 : vector<32x32xi32>
    %c1_i32_37 = arith.constant 1 : i32
    %76 = tpu.dynamic_rotate %47 by %c1_i32_37 dim 0 : vector<32x32xf32>, i32 -> vector<32x32xf32>
    %77 = arith.select %75, %73, %76 : vector<32x32xi1>, vector<32x32xf32>
    %c15_i32_38 = arith.constant 15 : i32
    %78 = vector.broadcast %c15_i32_38 : i32 to vector<32x32xi32>
    %79 = arith.cmpi eq, %72, %78 : vector<32x32xi32>
    %c31_i32_39 = arith.constant 31 : i32
    %80 = tpu.dynamic_rotate %47 by %c31_i32_39 dim 0 : vector<32x32xf32>, i32 -> vector<32x32xf32>
    %81 = arith.select %79, %73, %80 : vector<32x32xi1>, vector<32x32xf32>
    %c0_40 = arith.constant 0 : index
    %c0_41 = arith.constant 0 : index
    %c0_42 = arith.constant 0 : index
    %82 = vector.load %arg8[%c0_40, %c0_41, %c0_42] : memref<3x32x32xf32, #tpu.memory_space<vmem>>, vector<1x32x32xf32>
    %83 = vector.shape_cast %82 : vector<1x32x32xf32> to vector<32x32xf32>
    %cst_43 = arith.constant dense<0.000000e+00> : vector<32x32xf32>
    %84 = tpu.matmul %77, %83, %cst_43 {dimension_numbers = #tpu.dot_dimension_numbers<[1], [0], [0], [1], [0, 0, 1, 1], [], []>} : vector<32x32xf32>, vector<32x32xf32>, vector<32x32xf32> -> vector<32x32xf32>
    %c1_44 = arith.constant 1 : index
    %c0_45 = arith.constant 0 : index
    %c0_46 = arith.constant 0 : index
    %85 = vector.load %arg8[%c1_44, %c0_45, %c0_46] : memref<3x32x32xf32, #tpu.memory_space<vmem>>, vector<1x32x32xf32>
    %86 = vector.shape_cast %85 : vector<1x32x32xf32> to vector<32x32xf32>
    %cst_47 = arith.constant dense<0.000000e+00> : vector<32x32xf32>
    %87 = tpu.matmul %47, %86, %cst_47 {dimension_numbers = #tpu.dot_dimension_numbers<[1], [0], [0], [1], [0, 0, 1, 1], [], []>} : vector<32x32xf32>, vector<32x32xf32>, vector<32x32xf32> -> vector<32x32xf32>
    %88 = arith.addf %84, %87 : vector<32x32xf32>
    %c2_48 = arith.constant 2 : index
    %c0_49 = arith.constant 0 : index
    %c0_50 = arith.constant 0 : index
    %89 = vector.load %arg8[%c2_48, %c0_49, %c0_50] : memref<3x32x32xf32, #tpu.memory_space<vmem>>, vector<1x32x32xf32>
    %90 = vector.shape_cast %89 : vector<1x32x32xf32> to vector<32x32xf32>
    %cst_51 = arith.constant dense<0.000000e+00> : vector<32x32xf32>
    %91 = tpu.matmul %81, %90, %cst_51 {dimension_numbers = #tpu.dot_dimension_numbers<[1], [0], [0], [1], [0, 0, 1, 1], [], []>} : vector<32x32xf32>, vector<32x32xf32>, vector<32x32xf32> -> vector<32x32xf32>
    %92 = arith.addf %88, %91 : vector<32x32xf32>
    %c0_52 = arith.constant 0 : index
    %c0_53 = arith.constant 0 : index
    %93 = vector.load %arg9[%c0_52, %c0_53] : memref<1x32xf32, #tpu.memory_space<vmem>>, vector<1x32xf32>
    %94 = vector.broadcast %93 : vector<1x32xf32> to vector<32x32xf32>
    %95 = arith.mulf %92, %94 : vector<32x32xf32>
    %c0_54 = arith.constant 0 : index
    %c0_55 = arith.constant 0 : index
    %96 = vector.load %arg10[%c0_54, %c0_55] : memref<1x32xf32, #tpu.memory_space<vmem>>, vector<1x32xf32>
    %97 = vector.broadcast %96 : vector<1x32xf32> to vector<32x32xf32>
    %98 = arith.addf %95, %97 : vector<32x32xf32>
    %c0_56 = arith.constant 0 : index
    %c0_57 = arith.constant 0 : index
    %99 = vector.load %arg13[%c0_56, %c0_57] : memref<2x32xf32, #tpu.memory_space<vmem>>, vector<2x32xf32>
    %cst_58 = arith.constant dense<0.000000e+00> : vector<2x32xf32>
    %100 = tpu.matmul %99, %98, %cst_58 {dimension_numbers = #tpu.dot_dimension_numbers<[1], [0], [0], [1], [0, 0, 1, 1], [], []>} : vector<2x32xf32>, vector<32x32xf32>, vector<2x32xf32> -> vector<2x32xf32>
    %c0_59 = arith.constant 0 : index
    %c0_60 = arith.constant 0 : index
    %101 = vector.load %arg11[%c0_59, %c0_60] : memref<32x2xf32, #tpu.memory_space<vmem>>, vector<32x2xf32>
    %cst_61 = arith.constant dense<0.000000e+00> : vector<2x2xf32>
    %102 = tpu.matmul %100, %101, %cst_61 {dimension_numbers = #tpu.dot_dimension_numbers<[1], [0], [0], [1], [0, 0, 1, 1], [], []>} : vector<2x32xf32>, vector<32x2xf32>, vector<2x2xf32> -> vector<2x2xf32>
    %cst_62 = arith.constant 0.000000e+00 : f32
    %cst_63 = arith.constant 6.000000e+00 : f32
    %103 = vector.broadcast %cst_62 : f32 to vector<2x2xf32>
    %104 = arith.maximumf %103, %102 : vector<2x2xf32>
    %105 = vector.broadcast %cst_63 : f32 to vector<2x2xf32>
    %106 = arith.minimumf %105, %104 : vector<2x2xf32>
    %c0_64 = arith.constant 0 : index
    %c0_65 = arith.constant 0 : index
    %107 = vector.load %arg12[%c0_64, %c0_65] : memref<2x32xf32, #tpu.memory_space<vmem>>, vector<2x32xf32>
    %cst_66 = arith.constant dense<0.000000e+00> : vector<2x32xf32>
    %108 = tpu.matmul %106, %107, %cst_66 {dimension_numbers = #tpu.dot_dimension_numbers<[1], [0], [0], [1], [0, 0, 1, 1], [], []>} : vector<2x2xf32>, vector<2x32xf32>, vector<2x32xf32> -> vector<2x32xf32>
    %109 = arith.negf %108 : vector<2x32xf32>
    %110 = math.exp %109 : vector<2x32xf32>
    %cst_67 = arith.constant 1.000000e+00 : f32
    %111 = vector.broadcast %cst_67 : f32 to vector<2x32xf32>
    %112 = arith.addf %111, %110 : vector<2x32xf32>
    %113 = arith.divf %111, %112 : vector<2x32xf32>
    %c0_68 = arith.constant 0 : index
    %c0_69 = arith.constant 0 : index
    %114 = vector.load %arg14[%c0_68, %c0_69] : memref<32x2xf32, #tpu.memory_space<vmem>>, vector<32x2xf32>
    %cst_70 = arith.constant dense<0.000000e+00> : vector<32x32xf32>
    %115 = tpu.matmul %114, %113, %cst_70 {dimension_numbers = #tpu.dot_dimension_numbers<[1], [0], [0], [1], [0, 0, 1, 1], [], []>} : vector<32x2xf32>, vector<2x32xf32>, vector<32x32xf32> -> vector<32x32xf32>
    %116 = arith.mulf %98, %115 : vector<32x32xf32>
    %117 = arith.addf %116, %55 : vector<32x32xf32>
    %cst_71 = arith.constant 0.000000e+00 : f32
    %cst_72 = arith.constant 6.000000e+00 : f32
    %118 = vector.broadcast %cst_71 : f32 to vector<32x32xf32>
    %119 = arith.maximumf %118, %117 : vector<32x32xf32>
    %120 = vector.broadcast %cst_72 : f32 to vector<32x32xf32>
    %121 = arith.minimumf %120, %119 : vector<32x32xf32>
    %c0_73 = arith.constant 0 : index
    %c0_74 = arith.constant 0 : index
    %122 = vector.load %arg15[%c0_73, %c0_74] : memref<32x32xf32, #tpu.memory_space<vmem>>, vector<32x32xf32>
    tpu.vector_store %arg15[%c0_73, %c0_74], %121 {strides = array<i32>} : memref<32x32xf32, #tpu.memory_space<vmem>>, vector<32x32xf32>,
    return
  }
  func.func @transform_0(%arg0: i32) -> (i32, i32) {
    %c0_i32 = arith.constant 0 : i32
    %c0_i32_0 = arith.constant 0 : i32
    return %arg0, %c0_i32 : i32, i32
  }
  func.func @transform_1(%arg0: i32) -> (i32, i32, i32) {
    %c0_i32 = arith.constant 0 : i32
    %c0_i32_0 = arith.constant 0 : i32
    %c0_i32_1 = arith.constant 0 : i32
    %c0_i32_2 = arith.constant 0 : i32
    return %c0_i32, %c0_i32_0, %c0_i32_1 : i32, i32, i32
  }
  func.func @transform_2(%arg0: i32) -> (i32, i32) {
    %c0_i32 = arith.constant 0 : i32
    %c0_i32_0 = arith.constant 0 : i32
    %c0_i32_1 = arith.constant 0 : i32
    return %c0_i32, %c0_i32_0 : i32, i32
  }
  func.func @transform_3(%arg0: i32) -> (i32, i32) {
    %c0_i32 = arith.constant 0 : i32
    %c0_i32_0 = arith.constant 0 : i32
    %c0_i32_1 = arith.constant 0 : i32
    return %c0_i32, %c0_i32_0 : i32, i32
  }
  func.func @transform_4(%arg0: i32) -> (i32, i32) {
    %c0_i32 = arith.constant 0 : i32
    %c0_i32_0 = arith.constant 0 : i32
    %c0_i32_1 = arith.constant 0 : i32
    return %c0_i32, %c0_i32_0 : i32, i32
  }
  func.func @transform_5(%arg0: i32) -> (i32, i32) {
    %c0_i32 = arith.constant 0 : i32
    %c0_i32_0 = arith.constant 0 : i32
    %c0_i32_1 = arith.constant 0 : i32
    return %c0_i32, %c0_i32_0 : i32, i32
  }
  func.func @transform_6(%arg0: i32) -> (i32, i32) {
    %c0_i32 = arith.constant 0 : i32
    %c0_i32_0 = arith.constant 0 : i32
    %c0_i32_1 = arith.constant 0 : i32
    return %c0_i32, %c0_i32_0 : i32, i32
  }
  func.func @transform_7(%arg0: i32) -> (i32, i32, i32) {
    %c0_i32 = arith.constant 0 : i32
    %c0_i32_0 = arith.constant 0 : i32
    %c0_i32_1 = arith.constant 0 : i32
    %c0_i32_2 = arith.constant 0 : i32
    return %c0_i32, %c0_i32_0, %c0_i32_1 : i32, i32, i32
  }
  func.func @transform_8(%arg0: i32) -> (i32, i32) {
    %c0_i32 = arith.constant 0 : i32
    %c0_i32_0 = arith.constant 0 : i32
    %c0_i32_1 = arith.constant 0 : i32
    return %c0_i32, %c0_i32_0 : i32, i32
  }
  func.func @transform_9(%arg0: i32) -> (i32, i32) {
    %c0_i32 = arith.constant 0 : i32
    %c0_i32_0 = arith.constant 0 : i32
    %c0_i32_1 = arith.constant 0 : i32
    return %c0_i32, %c0_i32_0 : i32, i32
  }
  func.func @transform_10(%arg0: i32) -> (i32, i32) {
    %c0_i32 = arith.constant 0 : i32
    %c0_i32_0 = arith.constant 0 : i32
    %c0_i32_1 = arith.constant 0 : i32
    return %c0_i32, %c0_i32_0 : i32, i32
  }
  func.func @transform_11(%arg0: i32) -> (i32, i32) {
    %c0_i32 = arith.constant 0 : i32
    %c0_i32_0 = arith.constant 0 : i32
    %c0_i32_1 = arith.constant 0 : i32
    return %c0_i32, %c0_i32_0 : i32, i32
  }
  func.func @transform_12(%arg0: i32) -> (i32, i32) {
    %c0_i32 = arith.constant 0 : i32
    %c0_i32_0 = arith.constant 0 : i32
    %c0_i32_1 = arith.constant 0 : i32
    return %c0_i32, %c0_i32_0 : i32, i32
  }
  func.func @transform_13(%arg0: i32) -> (i32, i32) {
    %c0_i32 = arith.constant 0 : i32
    %c0_i32_0 = arith.constant 0 : i32
    %c0_i32_1 = arith.constant 0 : i32
    return %c0_i32, %c0_i32_0 : i32, i32
  }
  func.func @transform_14(%arg0: i32) -> (i32, i32) {
    %c0_i32 = arith.constant 0 : i32
    %c0_i32_0 = arith.constant 0 : i32
    return %arg0, %c0_i32 : i32, i32
  }
}

</mosaic_0001>

<llo_original>
// kernel: se_resnet1d_basic_dec_block.1
$region0: #{se_resnet1d_basic_dec_block.1}
  #allocation0 [shape = 'u32[]', space=smem, size = 0x4, offset = 0x4, fixed_abs, tag = 'smem constant byte address 0x4 - core index']
  #allocation1 [shape = 'u32[144,128]{1,0:T(1,128)}', space=vmem, size = 0x12000, scoped, tag = 'internal scratch']
  %s0 = inlined_call_operand.vmem [shape: f32[64,16], index: 0, kind: input, shape index: {}]
  %s1 = inlined_call_operand.vmem [shape: f32[3,16,32], index: 1, kind: input, shape index: {}]
  %s2 = inlined_call_operand.vmem [shape: f32[16,32], index: 2, kind: input, shape index: {}]
  %s3 = inlined_call_operand.hbm [shape: f32[1,32], index: 3, kind: input, shape index: {}]
  %s4 = inlined_call_operand.hbm [shape: f32[1,32], index: 4, kind: input, shape index: {}]
  %s5 = inlined_call_operand.vmem [shape: f32[1,32], index: 5, kind: input, shape index: {}]
  %s6 = inlined_call_operand.vmem [shape: f32[1,32], index: 6, kind: input, shape index: {}]
  %s7 = inlined_call_operand.vmem [shape: f32[3,32,32], index: 7, kind: input, shape index: {}]
  %s8 = inlined_call_operand.vmem [shape: f32[1,32], index: 8, kind: input, shape index: {}]
  %s9 = inlined_call_operand.vmem [shape: f32[1,32], index: 9, kind: input, shape index: {}]
  %s10 = inlined_call_operand.vmem [shape: f32[32,2], index: 10, kind: input, shape index: {}]
  %s11 = inlined_call_operand.vmem [shape: f32[2,32], index: 11, kind: input, shape index: {}]
  %s12 = inlined_call_operand.vmem [shape: f32[2,32], index: 12, kind: input, shape index: {}]
  %s13 = inlined_call_operand.vmem [shape: f32[32,2], index: 13, kind: input, shape index: {}]
  %s14 = inlined_call_operand.hbm [shape: f32[64,32], index: 14, kind: output, shape index: {}]
  %s15 = sld [smem:[#allocation0]]
  $region97: #{se_resnet1d_basic_dec_block.1} parent=0
    _
  %s17 = ssub.s32 1, %s15
  %s18 = scalar_select 0, %s17, %s15
  $region1: #{se_resnet1d_basic_dec_block.1} parent=0
    #allocation2 [shape = 'u8[512]{0}', space=vmem, size = 0x400, scoped, tag = 'input window, operand 3, single buffered']
    #allocation3 [shape = 's32[2]{0}', space=sflag, size = 0x8, scoped, tag = 'scoped memory for se_resnet1d_basic_dec_block.1']
    #allocation4 [shape = 's32[2]{0}', space=sflag, size = 0x8, scoped, tag = 'scoped memory for se_resnet1d_basic_dec_block.1']
    #allocation5 [shape = 'u8[512]{0}', space=vmem, size = 0x400, scoped, tag = 'input window, operand 4, single buffered']
    #allocation6 [shape = 's32[1]{0}', space=sflag, size = 0x4, scoped, tag = 'scoped memory for se_resnet1d_basic_dec_block.1']
    #allocation7 [shape = 'u8[32768]{0}', space=vmem, size = 0x8000, scoped, tag = 'output window, operand 0']
    %19 = vsyncpa [#allocation3], 0
    %20 = vsyncpa [#allocation6], 0
    %21 = vsyncpa [#allocation4], 0
    %s22 = scalar_lea.sflag [#allocation4], 1
    %23 = vsyncpa %s22, 0
    loop: start=0, step=1, limit=4
    $region2: #{se_resnet1d_basic_dec_block.1} parent=1 // loop_pre_header
      _
    $region3: #{se_resnet1d_basic_dec_block.1} parent=1 // loop_header
      %s25 = sphi 0, %s29
      %p26 = scmp.ge.s32.totalorder %s25, 4
      %s35 = sphi 0, %s37
      %s38 = sphi 0, %s35
      %s39 = sphi 0, %s38
      %s55 = sphi 0, %s39
      %s59 = sphi 0, %s59
      %s61 = sphi 0, %s59
      %s62 = sphi 0, %s61
      %s76 = sphi 0, %s62
      %s80 = sphi 0, %s80
      %s82 = sphi 0, %s80
      %s83 = sphi 0, %s82
      %s97 = sphi 0, %s83
      %s101 = sphi 0, %s101
      %s103 = sphi 0, %s101
      %s104 = sphi 0, %s103
      %s118 = sphi 0, %s104
      %s122 = sphi 0, %s122
      %s124 = sphi 0, %s122
      %s125 = sphi 0, %s124
      %s139 = sphi 0, %s125
      %s143 = sphi 0, %s143
      %s145 = sphi 0, %s143
      %s146 = sphi 0, %s145
      %s160 = sphi 0, %s146
      %s164 = sphi 0, %s164
      %s166 = sphi 0, %s164
      %s167 = sphi 0, %s166
      %s181 = sphi 0, %s167
      %s185 = sphi 0, %s185
      %s187 = sphi 0, %s185
      %s188 = sphi 0, %s187
      %s202 = sphi 0, %s188
      %s206 = sphi 0, %s206
      %s208 = sphi 0, %s206
      %s209 = sphi 0, %s208
      %s223 = sphi 0, %s209
      %s227 = sphi 0, %s227
      %s229 = sphi 0, %s227
      %s230 = sphi 0, %s229
      %s244 = sphi 0, %s230
      %s248 = sphi 0, %s248
      %s250 = sphi 0, %s248
      %s251 = sphi 0, %s250
      %s265 = sphi 0, %s251
      %s269 = sphi 0, %s269
      %s271 = sphi 0, %s269
      %s272 = sphi 0, %s271
      %s286 = sphi 0, %s272
      %s290 = sphi 0, %s290
      %s292 = sphi 0, %s290
      %s293 = sphi 0, %s292
      %s307 = sphi 0, %s293
      %s311 = sphi 0, %s311
      %s313 = sphi 0, %s311
      %s314 = sphi 0, %s313
      %s328 = sphi 0, %s314
      %s334 = sphi 0, %s336
      %s337 = sphi 0, %s334
      %s338 = sphi 0, %s337
      %s354 = sphi 0, %s338
    $region4: #{se_resnet1d_basic_dec_block.1} parent=1 // loop_header_branch
      %28 = sbr.rel (%p26) target = $region8
    $region5: #{se_resnet1d_basic_dec_block.1} parent=1 // loop_body
      %s30 = ssub.s32 %s25, 1
      %s31 = ssub.s32 %s25, 2
      %s32 = sadd.s32 %s25, 1
      %s33 = ssub.s32 %s25, %s32
      %p34 = scmp.eq.s32.totalorder %s33, 0
      %s36 = sadd.s32 %s35, 1
      %s37 = scalar_select %p34, %s35, %s36
      %p40 = pneg %p34
      %p41 = scmp.eq.s32.totalorder %s25, 1
      %p42 = por %p40, %p41
      %p43 = scmp.ne.s32.totalorder %s35, %s38
      %p44 = scmp.eq.s32.totalorder %s25, 0
      %p45 = por %p43, %p44
      %p46 = scmp.ne.s32.totalorder %s35, %s38
      %p47 = scmp.eq.s32.totalorder %s30, 1
      %p48 = por %p46, %p47
      %p49 = scmp.ne.s32.totalorder %s38, %s39
      %p50 = scmp.eq.s32.totalorder %s30, 0
      %p51 = por %p49, %p50
      %p52 = scmp.ne.s32.totalorder %s38, %s39
      %p53 = scmp.eq.s32.totalorder %s31, 1
      %p54 = por %p52, %p53
      %p56 = scmp.ne.s32.totalorder %s39, %s55
      %p57 = scmp.eq.s32.totalorder %s31, 0
      %p58 = por %p56, %p57
      %s60 = sadd.s32 %s59, 1
      %p63 = scmp.eq.s32.totalorder %s25, 1
      %p64 = scmp.ne.s32.totalorder %s59, %s61
      %p65 = scmp.eq.s32.totalorder %s25, 0
      %p66 = por %p64, %p65
      %p67 = scmp.ne.s32.totalorder %s59, %s61
      %p68 = scmp.eq.s32.totalorder %s30, 1
      %p69 = por %p67, %p68
      %p70 = scmp.ne.s32.totalorder %s61, %s62
      %p71 = scmp.eq.s32.totalorder %s30, 0
      %p72 = por %p70, %p71
      %p73 = scmp.ne.s32.totalorder %s61, %s62
      %p74 = scmp.eq.s32.totalorder %s31, 1
      %p75 = por %p73, %p74
      %p77 = scmp.ne.s32.totalorder %s62, %s76
      %p78 = scmp.eq.s32.totalorder %s31, 0
      %p79 = por %p77, %p78
      %s81 = sadd.s32 %s80, 1
      %p84 = scmp.eq.s32.totalorder %s25, 1
      %p85 = scmp.ne.s32.totalorder %s80, %s82
      %p86 = scmp.eq.s32.totalorder %s25, 0
      %p87 = por %p85, %p86
      %p88 = scmp.ne.s32.totalorder %s80, %s82
      %p89 = scmp.eq.s32.totalorder %s30, 1
      %p90 = por %p88, %p89
      %p91 = scmp.ne.s32.totalorder %s82, %s83
      %p92 = scmp.eq.s32.totalorder %s30, 0
      %p93 = por %p91, %p92
      %p94 = scmp.ne.s32.totalorder %s82, %s83
      %p95 = scmp.eq.s32.totalorder %s31, 1
      %p96 = por %p94, %p95
      %p98 = scmp.ne.s32.totalorder %s83, %s97
      %p99 = scmp.eq.s32.totalorder %s31, 0
      %p100 = por %p98, %p99
      %s102 = sadd.s32 %s101, 1
      %p105 = scmp.eq.s32.totalorder %s25, 1
      %p106 = scmp.ne.s32.totalorder %s101, %s103
      %p107 = scmp.eq.s32.totalorder %s25, 0
      %p108 = por %p106, %p107
      %p109 = scmp.ne.s32.totalorder %s101, %s103
      %p110 = scmp.eq.s32.totalorder %s30, 1
      %p111 = por %p109, %p110
      %p112 = scmp.ne.s32.totalorder %s103, %s104
      %p113 = scmp.eq.s32.totalorder %s30, 0
      %p114 = por %p112, %p113
      %p115 = scmp.ne.s32.totalorder %s103, %s104
      %p116 = scmp.eq.s32.totalorder %s31, 1
      %p117 = por %p115, %p116
      %p119 = scmp.ne.s32.totalorder %s104, %s118
      %p120 = scmp.eq.s32.totalorder %s31, 0
      %p121 = por %p119, %p120
      %s123 = sadd.s32 %s122, 1
      %p126 = scmp.eq.s32.totalorder %s25, 1
      %p127 = scmp.ne.s32.totalorder %s122, %s124
      %p128 = scmp.eq.s32.totalorder %s25, 0
      %p129 = por %p127, %p128
      %p130 = scmp.ne.s32.totalorder %s122, %s124
      %p131 = scmp.eq.s32.totalorder %s30, 1
      %p132 = por %p130, %p131
      %p133 = scmp.ne.s32.totalorder %s124, %s125
      %p134 = scmp.eq.s32.totalorder %s30, 0
      %p135 = por %p133, %p134
      %p136 = scmp.ne.s32.totalorder %s124, %s125
      %p137 = scmp.eq.s32.totalorder %s31, 1
      %p138 = por %p136, %p137
      %p140 = scmp.ne.s32.totalorder %s125, %s139
      %p141 = scmp.eq.s32.totalorder %s31, 0
      %p142 = por %p140, %p141
      %s144 = sadd.s32 %s143, 1
      %p147 = scmp.eq.s32.totalorder %s25, 1
      %p148 = scmp.ne.s32.totalorder %s143, %s145
      %p149 = scmp.eq.s32.totalorder %s25, 0
      %p150 = por %p148, %p149
      %p151 = scmp.ne.s32.totalorder %s143, %s145
      %p152 = scmp.eq.s32.totalorder %s30, 1
      %p153 = por %p151, %p152
      %p154 = scmp.ne.s32.totalorder %s145, %s146
      %p155 = scmp.eq.s32.totalorder %s30, 0
      %p156 = por %p154, %p155
      %p157 = scmp.ne.s32.totalorder %s145, %s146
      %p158 = scmp.eq.s32.totalorder %s31, 1
      %p159 = por %p157, %p158
      %p161 = scmp.ne.s32.totalorder %s146, %s160
      %p162 = scmp.eq.s32.totalorder %s31, 0
      %p163 = por %p161, %p162
      %s165 = sadd.s32 %s164, 1
      %p168 = scmp.eq.s32.totalorder %s25, 1
      %p169 = scmp.ne.s32.totalorder %s164, %s166
      %p170 = scmp.eq.s32.totalorder %s25, 0
      %p171 = por %p169, %p170
      %p172 = scmp.ne.s32.totalorder %s164, %s166
      %p173 = scmp.eq.s32.totalorder %s30, 1
      %p174 = por %p172, %p173
      %p175 = scmp.ne.s32.totalorder %s166, %s167
      %p176 = scmp.eq.s32.totalorder %s30, 0
      %p177 = por %p175, %p176
      %p178 = scmp.ne.s32.totalorder %s166, %s167
      %p179 = scmp.eq.s32.totalorder %s31, 1
      %p180 = por %p178, %p179
      %p182 = scmp.ne.s32.totalorder %s167, %s181
      %p183 = scmp.eq.s32.totalorder %s31, 0
      %p184 = por %p182, %p183
      %s186 = sadd.s32 %s185, 1
      %p189 = scmp.eq.s32.totalorder %s25, 1
      %p190 = scmp.ne.s32.totalorder %s185, %s187
      %p191 = scmp.eq.s32.totalorder %s25, 0
      %p192 = por %p190, %p191
      %p193 = scmp.ne.s32.totalorder %s185, %s187
      %p194 = scmp.eq.s32.totalorder %s30, 1
      %p195 = por %p193, %p194
      %p196 = scmp.ne.s32.totalorder %s187, %s188
      %p197 = scmp.eq.s32.totalorder %s30, 0
      %p198 = por %p196, %p197
      %p199 = scmp.ne.s32.totalorder %s187, %s188
      %p200 = scmp.eq.s32.totalorder %s31, 1
      %p201 = por %p199, %p200
      %p203 = scmp.ne.s32.totalorder %s188, %s202
      %p204 = scmp.eq.s32.totalorder %s31, 0
      %p205 = por %p203, %p204
      %s207 = sadd.s32 %s206, 1
      %p210 = scmp.eq.s32.totalorder %s25, 1
      %p211 = scmp.ne.s32.totalorder %s206, %s208
      %p212 = scmp.eq.s32.totalorder %s25, 0
      %p213 = por %p211, %p212
      %p214 = scmp.ne.s32.totalorder %s206, %s208
      %p215 = scmp.eq.s32.totalorder %s30, 1
      %p216 = por %p214, %p215
      %p217 = scmp.ne.s32.totalorder %s208, %s209
      %p218 = scmp.eq.s32.totalorder %s30, 0
      %p219 = por %p217, %p218
      %p220 = scmp.ne.s32.totalorder %s208, %s209
      %p221 = scmp.eq.s32.totalorder %s31, 1
      %p222 = por %p220, %p221
      %p224 = scmp.ne.s32.totalorder %s209, %s223
      %p225 = scmp.eq.s32.totalorder %s31, 0
      %p226 = por %p224, %p225
      %s228 = sadd.s32 %s227, 1
      %p231 = scmp.eq.s32.totalorder %s25, 1
      %p232 = scmp.ne.s32.totalorder %s227, %s229
      %p233 = scmp.eq.s32.totalorder %s25, 0
      %p234 = por %p232, %p233
      %p235 = scmp.ne.s32.totalorder %s227, %s229
      %p236 = scmp.eq.s32.totalorder %s30, 1
      %p237 = por %p235, %p236
      %p238 = scmp.ne.s32.totalorder %s229, %s230
      %p239 = scmp.eq.s32.totalorder %s30, 0
      %p240 = por %p238, %p239
      %p241 = scmp.ne.s32.totalorder %s229, %s230
      %p242 = scmp.eq.s32.totalorder %s31, 1
      %p243 = por %p241, %p242
      %p245 = scmp.ne.s32.totalorder %s230, %s244
      %p246 = scmp.eq.s32.totalorder %s31, 0
      %p247 = por %p245, %p246
      %s249 = sadd.s32 %s248, 1
      %p252 = scmp.eq.s32.totalorder %s25, 1
      %p253 = scmp.ne.s32.totalorder %s248, %s250
      %p254 = scmp.eq.s32.totalorder %s25, 0
      %p255 = por %p253, %p254
      %p256 = scmp.ne.s32.totalorder %s248, %s250
      %p257 = scmp.eq.s32.totalorder %s30, 1
      %p258 = por %p256, %p257
      %p259 = scmp.ne.s32.totalorder %s250, %s251
      %p260 = scmp.eq.s32.totalorder %s30, 0
      %p261 = por %p259, %p260
      %p262 = scmp.ne.s32.totalorder %s250, %s251
      %p263 = scmp.eq.s32.totalorder %s31, 1
      %p264 = por %p262, %p263
      %p266 = scmp.ne.s32.totalorder %s251, %s265
      %p267 = scmp.eq.s32.totalorder %s31, 0
      %p268 = por %p266, %p267
      %s270 = sadd.s32 %s269, 1
      %p273 = scmp.eq.s32.totalorder %s25, 1
      %p274 = scmp.ne.s32.totalorder %s269, %s271
      %p275 = scmp.eq.s32.totalorder %s25, 0
      %p276 = por %p274, %p275
      %p277 = scmp.ne.s32.totalorder %s269, %s271
      %p278 = scmp.eq.s32.totalorder %s30, 1
      %p279 = por %p277, %p278
      %p280 = scmp.ne.s32.totalorder %s271, %s272
      %p281 = scmp.eq.s32.totalorder %s30, 0
      %p282 = por %p280, %p281
      %p283 = scmp.ne.s32.totalorder %s271, %s272
      %p284 = scmp.eq.s32.totalorder %s31, 1
      %p285 = por %p283, %p284
      %p287 = scmp.ne.s32.totalorder %s272, %s286
      %p288 = scmp.eq.s32.totalorder %s31, 0
      %p289 = por %p287, %p288
      %s291 = sadd.s32 %s290, 1
      %p294 = scmp.eq.s32.totalorder %s25, 1
      %p295 = scmp.ne.s32.totalorder %s290, %s292
      %p296 = scmp.eq.s32.totalorder %s25, 0
      %p297 = por %p295, %p296
      %p298 = scmp.ne.s32.totalorder %s290, %s292
      %p299 = scmp.eq.s32.totalorder %s30, 1
      %p300 = por %p298, %p299
      %p301 = scmp.ne.s32.totalorder %s292, %s293
      %p302 = scmp.eq.s32.totalorder %s30, 0
      %p303 = por %p301, %p302
      %p304 = scmp.ne.s32.totalorder %s292, %s293
      %p305 = scmp.eq.s32.totalorder %s31, 1
      %p306 = por %p304, %p305
      %p308 = scmp.ne.s32.totalorder %s293, %s307
      %p309 = scmp.eq.s32.totalorder %s31, 0
      %p310 = por %p308, %p309
      %s312 = sadd.s32 %s311, 1
      %p315 = scmp.eq.s32.totalorder %s25, 1
      %p316 = scmp.ne.s32.totalorder %s311, %s313
      %p317 = scmp.eq.s32.totalorder %s25, 0
      %p318 = por %p316, %p317
      %p319 = scmp.ne.s32.totalorder %s311, %s313
      %p320 = scmp.eq.s32.totalorder %s30, 1
      %p321 = por %p319, %p320
      %p322 = scmp.ne.s32.totalorder %s313, %s314
      %p323 = scmp.eq.s32.totalorder %s30, 0
      %p324 = por %p322, %p323
      %p325 = scmp.ne.s32.totalorder %s313, %s314
      %p326 = scmp.eq.s32.totalorder %s31, 1
      %p327 = por %p325, %p326
      %p329 = scmp.ne.s32.totalorder %s314, %s328
      %p330 = scmp.eq.s32.totalorder %s31, 0
      %p331 = por %p329, %p330
      %s332 = ssub.s32 %s25, %s32
      %p333 = scmp.eq.s32.totalorder %s332, 0
      %s335 = sadd.s32 %s334, 1
      %s336 = scalar_select %p333, %s334, %s335
      %p339 = pneg %p333
      %p340 = scmp.eq.s32.totalorder %s25, 1
      %p341 = por %p339, %p340
      %p342 = scmp.ne.s32.totalorder %s334, %s337
      %p343 = scmp.eq.s32.totalorder %s25, 0
      %p344 = por %p342, %p343
      %p345 = scmp.ne.s32.totalorder %s334, %s337
      %p346 = scmp.eq.s32.totalorder %s30, 1
      %p347 = por %p345, %p346
      %p348 = scmp.ne.s32.totalorder %s337, %s338
      %p349 = scmp.eq.s32.totalorder %s30, 0
      %p350 = por %p348, %p349
      %p351 = scmp.ne.s32.totalorder %s337, %s338
      %p352 = scmp.eq.s32.totalorder %s31, 1
      %p353 = por %p351, %p352
      %p355 = scmp.ne.s32.totalorder %s338, %s354
      %p356 = scmp.eq.s32.totalorder %s31, 0
      %p357 = por %p355, %p356
      %p358 = scmp.le.s32.totalorder 1, %s25
      %p359 = scmp.lt.s32.totalorder %s25, 3
      %p360 = pnand %p358, %p359
      %p361 = pneg %p360
      // Predicated region
      $region9: #{se_resnet1d_basic_dec_block.1} parent=5 // pred_check
        _
      $region10: #{se_resnet1d_basic_dec_block.1} parent=5 // pred_check_branch
        %363 = sbr.rel (%p360) target = $region12
      $region11: #{se_resnet1d_basic_dec_block.1} parent=5 // pred_region
        %s364 = ssub.s32 %s25, 1
        // Predicated region
        $region13: #{se_resnet1d_basic_dec_block.1} parent=11 // pred_check
          %p365 = pneg %p72
        $region14: #{se_resnet1d_basic_dec_block.1} parent=11 // pred_check_branch
          %367 = sbr.rel (%p365) target = $region16
        $region15: #{se_resnet1d_basic_dec_block.1} parent=11 // pred_region
          _
        $region16: #{se_resnet1d_basic_dec_block.1} parent=11 // pred_fallthru
          _
        // Predicated region
        $region17: #{se_resnet1d_basic_dec_block.1} parent=11 // pred_check
          %p368 = pneg %p93
        $region18: #{se_resnet1d_basic_dec_block.1} parent=11 // pred_check_branch
          %370 = sbr.rel (%p368) target = $region20
        $region19: #{se_resnet1d_basic_dec_block.1} parent=11 // pred_region
          _
        $region20: #{se_resnet1d_basic_dec_block.1} parent=11 // pred_fallthru
          _
        // Predicated region
        $region21: #{se_resnet1d_basic_dec_block.1} parent=11 // pred_check
          %p371 = pneg %p114
        $region22: #{se_resnet1d_basic_dec_block.1} parent=11 // pred_check_branch
          %373 = sbr.rel (%p371) target = $region24
        $region23: #{se_resnet1d_basic_dec_block.1} parent=11 // pred_region
          %s375 = ssub.s32 16, 16
          %376 = vsyncadd [#allocation3], %s375
          %s378 = sshll.u32 [#allocation2], 4
          %s379 = int_to_ptr.vmem [resolvable:$true] %s378
          %381 = dma.hbm_to_vmem [thread:$0]  %s3, 16, %s379, [#allocation3]
        $region24: #{se_resnet1d_basic_dec_block.1} parent=11 // pred_fallthru
          _
        // Predicated region
        $region25: #{se_resnet1d_basic_dec_block.1} parent=11 // pred_check
          %p382 = pneg %p135
        $region26: #{se_resnet1d_basic_dec_block.1} parent=11 // pred_check_branch
          %384 = sbr.rel (%p382) target = $region28
        $region27: #{se_resnet1d_basic_dec_block.1} parent=11 // pred_region
          %s386 = ssub.s32 16, 16
          %387 = vsyncadd [#allocation6], %s386
          %s389 = sshll.u32 [#allocation5], 4
          %s390 = int_to_ptr.vmem [resolvable:$true] %s389
          %392 = dma.hbm_to_vmem [thread:$0]  %s4, 16, %s390, [#allocation6]
        $region28: #{se_resnet1d_basic_dec_block.1} parent=11 // pred_fallthru
          _
        // Predicated region
        $region29: #{se_resnet1d_basic_dec_block.1} parent=11 // pred_check
          %p393 = pneg %p156
        $region30: #{se_resnet1d_basic_dec_block.1} parent=11 // pred_check_branch
          %395 = sbr.rel (%p393) target = $region32
        $region31: #{se_resnet1d_basic_dec_block.1} parent=11 // pred_region
          _
        $region32: #{se_resnet1d_basic_dec_block.1} parent=11 // pred_fallthru
          _
        // Predicated region
        $region33: #{se_resnet1d_basic_dec_block.1} parent=11 // pred_check
          %p396 = pneg %p177
        $region34: #{se_resnet1d_basic_dec_block.1} parent=11 // pred_check_branch
          %398 = sbr.rel (%p396) target = $region36
        $region35: #{se_resnet1d_basic_dec_block.1} parent=11 // pred_region
          _
        $region36: #{se_resnet1d_basic_dec_block.1} parent=11 // pred_fallthru
          _
        // Predicated region
        $region37: #{se_resnet1d_basic_dec_block.1} parent=11 // pred_check
          %p399 = pneg %p198
        $region38: #{se_resnet1d_basic_dec_block.1} parent=11 // pred_check_branch
          %401 = sbr.rel (%p399) target = $region40
        $region39: #{se_resnet1d_basic_dec_block.1} parent=11 // pred_region
          _
        $region40: #{se_resnet1d_basic_dec_block.1} parent=11 // pred_fallthru
          _
        // Predicated region
        $region41: #{se_resnet1d_basic_dec_block.1} parent=11 // pred_check
          %p402 = pneg %p219
        $region42: #{se_resnet1d_basic_dec_block.1} parent=11 // pred_check_branch
          %404 = sbr.rel (%p402) target = $region44
        $region43: #{se_resnet1d_basic_dec_block.1} parent=11 // pred_region
          _
        $region44: #{se_resnet1d_basic_dec_block.1} parent=11 // pred_fallthru
          _
        // Predicated region
        $region45: #{se_resnet1d_basic_dec_block.1} parent=11 // pred_check
          %p405 = pneg %p240
        $region46: #{se_resnet1d_basic_dec_block.1} parent=11 // pred_check_branch
          %407 = sbr.rel (%p405) target = $region48
        $region47: #{se_resnet1d_basic_dec_block.1} parent=11 // pred_region
          _
        $region48: #{se_resnet1d_basic_dec_block.1} parent=11 // pred_fallthru
          _
        // Predicated region
        $region49: #{se_resnet1d_basic_dec_block.1} parent=11 // pred_check
          %p408 = pneg %p261
        $region50: #{se_resnet1d_basic_dec_block.1} parent=11 // pred_check_branch
          %410 = sbr.rel (%p408) target = $region52
        $region51: #{se_resnet1d_basic_dec_block.1} parent=11 // pred_region
          _
        $region52: #{se_resnet1d_basic_dec_block.1} parent=11 // pred_fallthru
          _
        // Predicated region
        $region53: #{se_resnet1d_basic_dec_block.1} parent=11 // pred_check
          %p411 = pneg %p282
        $region54: #{se_resnet1d_basic_dec_block.1} parent=11 // pred_check_branch
          %413 = sbr.rel (%p411) target = $region56
        $region55: #{se_resnet1d_basic_dec_block.1} parent=11 // pred_region
          _
        $region56: #{se_resnet1d_basic_dec_block.1} parent=11 // pred_fallthru
          _
        // Predicated region
        $region57: #{se_resnet1d_basic_dec_block.1} parent=11 // pred_check
          %p414 = pneg %p303
        $region58: #{se_resnet1d_basic_dec_block.1} parent=11 // pred_check_branch
          %416 = sbr.rel (%p414) target = $region60
        $region59: #{se_resnet1d_basic_dec_block.1} parent=11 // pred_region
          _
        $region60: #{se_resnet1d_basic_dec_block.1} parent=11 // pred_fallthru
          _
        // Predicated region
        $region61: #{se_resnet1d_basic_dec_block.1} parent=11 // pred_check
          %p417 = pneg %p324
        $region62: #{se_resnet1d_basic_dec_block.1} parent=11 // pred_check_branch
          %419 = sbr.rel (%p417) target = $region64
        $region63: #{se_resnet1d_basic_dec_block.1} parent=11 // pred_region
          _
        $region64: #{se_resnet1d_basic_dec_block.1} parent=11 // pred_fallthru
          _
      $region12: #{se_resnet1d_basic_dec_block.1} parent=5 // pred_fallthru
        _
      %p420 = scmp.lt.s32.totalorder %s25, 2
      // Predicated region
      $region65: #{se_resnet1d_basic_dec_block.1} parent=5 // pred_check
        %p421 = pneg %p420
      $region66: #{se_resnet1d_basic_dec_block.1} parent=5 // pred_check_branch
        %423 = sbr.rel (%p421) target = $region68
      $region67: #{se_resnet1d_basic_dec_block.1} parent=5 // pred_region
        // Predicated region
        $region69: #{se_resnet1d_basic_dec_block.1} parent=67 // pred_check
          %p424 = pneg %p45
        $region70: #{se_resnet1d_basic_dec_block.1} parent=67 // pred_check_branch
          %426 = sbr.rel (%p424) target = $region72
        $region71: #{se_resnet1d_basic_dec_block.1} parent=67 // pred_region
          %s427 = smul.u32 4, %s25
          %p428 = scmp.lt.s32.totalorder %s427, 7
          %s429 = scalar_select %p428, %s427, 7
          %s430 = smul.addr %s429, 8
          %s431 = scalar_lea.vmem %s0, %s430
          %s432 = smul.u32 4, %s25
        $region72: #{se_resnet1d_basic_dec_block.1} parent=67 // pred_fallthru
          _
      $region68: #{se_resnet1d_basic_dec_block.1} parent=5 // pred_fallthru
        _
      %p433 = scmp.le.s32.totalorder 1, %s25
      %p434 = scmp.lt.s32.totalorder %s25, 3
      %p435 = pnand %p433, %p434
      %p436 = pneg %p435
      // Predicated region
      $region73: #{se_resnet1d_basic_dec_block.1} parent=5 // pred_check
        _
      $region74: #{se_resnet1d_basic_dec_block.1} parent=5 // pred_check_branch
        %438 = sbr.rel (%p435) target = $region76
      $region75: #{se_resnet1d_basic_dec_block.1} parent=5 // pred_region
        %s439 = ssub.s32 %s25, 1
        // Predicated region
        $region77: #{se_resnet1d_basic_dec_block.1} parent=75 // pred_check
          %p440 = pneg %p114
        $region78: #{se_resnet1d_basic_dec_block.1} parent=75 // pred_check_branch
          %442 = sbr.rel (%p440) target = $region80
        $region79: #{se_resnet1d_basic_dec_block.1} parent=75 // pred_region
          %443 = dma.done [#allocation3], 16
        $region80: #{se_resnet1d_basic_dec_block.1} parent=75 // pred_fallthru
          _
        // Predicated region
        $region81: #{se_resnet1d_basic_dec_block.1} parent=75 // pred_check
          %p444 = pneg %p135
        $region82: #{se_resnet1d_basic_dec_block.1} parent=75 // pred_check_branch
          %446 = sbr.rel (%p444) target = $region84
        $region83: #{se_resnet1d_basic_dec_block.1} parent=75 // pred_region
          %447 = dma.done [#allocation6], 16
        $region84: #{se_resnet1d_basic_dec_block.1} parent=75 // pred_fallthru
          _
        %s448 = smul.u32 4, %s30
        %p449 = scmp.lt.s32.totalorder %s448, 7
        %s450 = scalar_select %p449, %s448, 7
        %s451 = smul.addr %s450, 8
        %s452 = scalar_lea.vmem %s0, %s451
        %p453 = pneg %p51
        %p454 = pneg %p48
        %p455 = pneg %p72
        %p456 = pneg %p69
        %p457 = pneg %p93
        %p458 = pneg %p90
        %p459 = pneg %p114
        %p460 = pneg %p111
        %p461 = pneg %p135
        %p462 = pneg %p132
        %p463 = pneg %p156
        %p464 = pneg %p153
        %p465 = pneg %p177
        %p466 = pneg %p174
        %p467 = pneg %p198
        %p468 = pneg %p195
        %p469 = pneg %p219
        %p470 = pneg %p216
        %p471 = pneg %p240
        %p472 = pneg %p237
        %p473 = pneg %p261
        %p474 = pneg %p258
        %p475 = pneg %p282
        %p476 = pneg %p279
        %p477 = pneg %p303
        %p478 = pneg %p300
        %p479 = pneg %p324
        %p480 = pneg %p321
        %p481 = pneg %p350
        %p482 = pneg %p347
        %s483 = sand.u32 %s337, 1
        %s484 = scalar_lea.sflag [#allocation4], %s483
        %s485 = sand.u32 %s337, 1
        %s486 = smul.addr %s485, 32
        %s487 = scalar_lea.vmem [#allocation7], %s486
        %s488 = smul.u32 4, %s30
        %p489 = scmp.lt.s32.totalorder %s488, 7
        %s490 = scalar_select %p489, %s488, 7
        %s491 = smul.addr %s490, 8
        %s492 = scalar_lea.vmem %s0, %s491
        %s493 = smul.u32 4, %s30
        %s494 = smul.u32 4, %s30
        %v495 = vld [vmem:[%s492] sm:$0xff]
        %v496 = vld [vmem:[%s492 + $0x8] sm:$0xff]
        %v497 = vld [vmem:[%s492 + $0x10] sm:$0xff]
        %v498 = vld [vmem:[%s492 + $0x18] sm:$0xff]
        %v499 = vlaneseq
        %v500 = vshrl.u32 %v499, 7
        %v501 = vadd.s32 %v500, 8
        %v502 = vadd.s32 %v500, 16
        %v503 = vadd.s32 %v500, 24
        %vm504 = vcmp.lt.s32.totalorder %v500, 0
        %v505 = vsub.s32 0, %v500
        %v506 = vsel %vm504, %v505, %v500
        %v507 = vshrl.u32 %v506, 4
        %v508 = vand.u32 %v506, 15
        %v509 = vsub.s32 0, %v508
        %v510 = vsel %vm504, %v509, %v508
        %vm511 = vcmp.lt.s32.totalorder %v501, 0
        %v512 = vsub.s32 0, %v501
        %v513 = vsel %vm511, %v512, %v501
        %v514 = vshrl.u32 %v513, 4
        %v515 = vand.u32 %v513, 15
        %v516 = vsub.s32 0, %v515
        %v517 = vsel %vm511, %v516, %v515
        %vm518 = vcmp.lt.s32.totalorder %v502, 0
        %v519 = vsub.s32 0, %v502
        %v520 = vsel %vm518, %v519, %v502
        %v521 = vshrl.u32 %v520, 4
        %v522 = vand.u32 %v520, 15
        %v523 = vsub.s32 0, %v522
        %v524 = vsel %vm518, %v523, %v522
        %vm525 = vcmp.lt.s32.totalorder %v503, 0
        %v526 = vsub.s32 0, %v503
        %v527 = vsel %vm525, %v526, %v503
        %v528 = vshrl.u32 %v527, 4
        %v529 = vand.u32 %v527, 15
        %v530 = vsub.s32 0, %v529
        %v531 = vsel %vm525, %v530, %v529
        %vm532 = vcmp.ne.s32.totalorder %v510, 0
        %vm533 = vcmp.ne.s32.totalorder %v517, 0
        %vm534 = vcmp.ne.s32.totalorder %v524, 0
        %vm535 = vcmp.ne.s32.totalorder %v531, 0
        %vm536 = vcmp.lt.s32.totalorder %v510, 0
        %vm537 = vcmp.lt.s32.totalorder %v517, 0
        %vm538 = vcmp.lt.s32.totalorder %v524, 0
        %vm539 = vcmp.lt.s32.totalorder %v531, 0
        %vm540 = vmand %vm536, %vm532
        %vm541 = vmand %vm537, %vm533
        %vm542 = vmand %vm538, %vm534
        %vm543 = vmand %vm539, %vm535
        %v544 = vadd.s32 %v510, 16
        %v545 = vadd.s32 %v517, 16
        %v546 = vadd.s32 %v524, 16
        %v547 = vadd.s32 %v531, 16
        %v548 = vsel %vm540, %v544, %v510
        %v549 = vsel %vm541, %v545, %v517
        %v550 = vsel %vm542, %v546, %v524
        %v551 = vsel %vm543, %v547, %v531
        %vm552 = vcmp.eq.s32.totalorder %v548, 0
        %vm553 = vcmp.eq.s32.totalorder %v549, 0
        %vm554 = vcmp.eq.s32.totalorder %v550, 0
        %vm555 = vcmp.eq.s32.totalorder %v551, 0
        %v556 = vrot.slane %v495, 7
        %v557 = vrot.slane %v496, 7
        %v558 = vrot.slane %v497, 7
        %v559 = vrot.slane %v498, 7
        %vm560 = vcmp.lt.s32.totalorder %v500, 1
        %v561 = vsel %vm560, %v558, %v559
        %v562 = vsel %vm560, %v557, %v558
        %v563 = vsel %vm560, %v556, %v557
        %v564 = vsel %vm560, %v559, %v556
        %v565 = vsel %vm552, 0.0, %v564
        %v566 = vsel %vm553, 0.0, %v563
        %v567 = vsel %vm554, 0.0, %v562
        %v568 = vsel %vm555, 0.0, %v561
        %vm569 = vcmp.eq.s32.totalorder %v548, 15
        %vm570 = vcmp.eq.s32.totalorder %v549, 15
        %vm571 = vcmp.eq.s32.totalorder %v550, 15
        %vm572 = vcmp.eq.s32.totalorder %v551, 15
        %v573 = vrot.slane %v495, 1
        %v574 = vrot.slane %v496, 1
        %v575 = vrot.slane %v497, 1
        %v576 = vrot.slane %v498, 1
        %vm577 = vcmp.lt.s32.totalorder %v500, 7
        %v578 = vsel %vm577, %v575, %v576
        %v579 = vsel %vm577, %v574, %v575
        %v580 = vsel %vm577, %v573, %v574
        %v581 = vsel %vm577, %v576, %v573
        %v582 = vsel %vm569, 0.0, %v580
        %v583 = vsel %vm570, 0.0, %v579
        %v584 = vsel %vm571, 0.0, %v578
        %v585 = vsel %vm572, 0.0, %v581
        %v586 = vld [vmem:[%s1] sm:$0xff]
        %v587 = vld [vmem:[%s1 + $0x8] sm:$0xff]
        %s588 = scalar_lea.vmem %s1, 16
        %v589 = vld [vmem:[%s588] sm:$0xff]
        %v590 = vld [vmem:[%s588 + $0x8] sm:$0xff]
        %vm591 = vcmask 130048
        %v593 = vsel %vm591, %v495, 0
        %v596 = vsel %vm591, %v496, 0
        %v599 = vsel %vm591, %v497, 0
        %v602 = vsel %vm591, %v498, 0
        %604 = vmatprep.subr.mxu0 0.0
        %605 = vmatpush1.msra.mxu0 0.0
        %606 = vmatprep.subr.mxu0 0.0
        %607 = vmatpush1.msra.mxu0 0.0
        %608 = vmatprep.subr.mxu0 0.0
        %609 = vmatpush1.msra.mxu0 0.0
        %610 = vmatprep.subr.mxu0 0.0
        %611 = vmatpush1.msra.mxu0 0.0
        %612 = vmatprep.subr.mxu0 0.0
        %613 = vmatpush1.msra.mxu0 0.0
        %614 = vmatprep.subr.mxu0 0.0
        %615 = vmatpush1.msra.mxu0 0.0
        %616 = vmatprep.subr.mxu0 0.0
        %617 = vmatpush1.msra.mxu0 0.0
        %618 = vmatprep.subr.mxu0 0.0
        %619 = vmatpush1.msra.mxu0 0.0
        %620 = vmatprep.subr.mxu0 0.0
        %621 = vmatpush1.msra.mxu0 0.0
        %622 = vmatprep.subr.mxu0 0.0
        %623 = vmatpush1.msra.mxu0 0.0
        %624 = vmatprep.subr.mxu0 0.0
        %625 = vmatpush1.msra.mxu0 0.0
        %626 = vmatprep.subr.mxu0 0.0
        %627 = vmatpush1.msra.mxu0 0.0
        %628 = vmatprep.subr.mxu0 0.0
        %629 = vmatpush1.msra.mxu0 0.0
        %630 = vmatprep.subr.mxu0 0.0
        %631 = vmatpush1.msra.mxu0 0.0
        %632 = vmatprep.subr.mxu0 0.0
        %633 = vmatpush1.msra.mxu0 %v590
        %634 = vmatprep.subr.mxu0 0.0
        %635 = vmatpush1.msra.mxu0 %v589
        %636 = vmatprep.subr.mxu0 0.0
        %637 = vmatpush2.msra.mxu0 0.0
        %638 = vmatprep.subr.mxu0 0.0
        %639 = vmatpush2.msra.mxu0 0.0
        %640 = vmatprep.subr.mxu0 0.0
        %641 = vmatpush2.msra.mxu0 0.0
        %642 = vmatprep.subr.mxu0 0.0
        %643 = vmatpush2.msra.mxu0 0.0
        %644 = vmatprep.subr.mxu0 0.0
        %645 = vmatpush2.msra.mxu0 0.0
        %646 = vmatprep.subr.mxu0 0.0
        %647 = vmatpush2.msra.mxu0 0.0
        %648 = vmatprep.subr.mxu0 0.0
        %649 = vmatpush2.msra.mxu0 0.0
        %650 = vmatprep.subr.mxu0 0.0
        %651 = vmatpush2.msra.mxu0 0.0
        %652 = vmatprep.subr.mxu0 0.0
        %653 = vmatpush2.msra.mxu0 0.0
        %654 = vmatprep.subr.mxu0 0.0
        %655 = vmatpush2.msra.mxu0 0.0
        %656 = vmatprep.subr.mxu0 0.0
        %657 = vmatpush2.msra.mxu0 0.0
        %658 = vmatprep.subr.mxu0 0.0
        %659 = vmatpush2.msra.mxu0 0.0
        %660 = vmatprep.subr.mxu0 0.0
        %661 = vmatpush2.msra.mxu0 0.0
        %662 = vmatprep.subr.mxu0 0.0
        %663 = vmatpush2.msra.mxu0 0.0
        %664 = vmatprep.subr.mxu0 0.0
        %665 = vmatpush2.msra.mxu0 0.0
        %666 = vmatprep.subr.mxu0 0.0
        %667 = vmatpush2.msra.mxu0 0.0
        %668 = vmatprep.mubr.f32.mxu0 0.0
        %669 = vmatmul.mubr.f32.gmra.mxu0 %v593
        %v670 = vpop.f32.mrf.mxu0
        %v671 = vadd.f32 0.0, %v670
        %v672 = vpop.f32.mrf.mxu0
        %673 = vmatprep.mubr.f32.mxu0 0.0
        %674 = vmatmul.mubr.f32.gmra.mxu0 %v596
        %v675 = vpop.f32.mrf.mxu0
        %v676 = vadd.f32 0.0, %v675
        %v677 = vpop.f32.mrf.mxu0
        %678 = vmatprep.mubr.f32.mxu0 0.0
        %679 = vmatmul.mubr.f32.gmra.mxu0 %v599
        %v680 = vpop.f32.mrf.mxu0
        %v681 = vadd.f32 0.0, %v680
        %v682 = vpop.f32.mrf.mxu0
        %683 = vmatprep.mubr.f32.mxu0 0.0
        %684 = vmatmul.mubr.f32.gmra.mxu0 %v602
        %v685 = vpop.f32.mrf.mxu0
        %v686 = vadd.f32 0.0, %v685
        %v687 = vpop.f32.mrf.mxu0
        %688 = vdwg.mxu0
        %v690 = vsel %vm591, %v565, 0
        %v693 = vsel %vm591, %v566, 0
        %v696 = vsel %vm591, %v567, 0
        %v699 = vsel %vm591, %v568, 0
        %701 = vmatprep.subr.mxu0 0.0
        %702 = vmatpush1.msra.mxu0 0.0
        %703 = vmatprep.subr.mxu0 0.0
        %704 = vmatpush1.msra.mxu0 0.0
        %705 = vmatprep.subr.mxu0 0.0
        %706 = vmatpush1.msra.mxu0 0.0
        %707 = vmatprep.subr.mxu0 0.0
        %708 = vmatpush1.msra.mxu0 0.0
        %709 = vmatprep.subr.mxu0 0.0
        %710 = vmatpush1.msra.mxu0 0.0
        %711 = vmatprep.subr.mxu0 0.0
        %712 = vmatpush1.msra.mxu0 0.0
        %713 = vmatprep.subr.mxu0 0.0
        %714 = vmatpush1.msra.mxu0 0.0
        %715 = vmatprep.subr.mxu0 0.0
        %716 = vmatpush1.msra.mxu0 0.0
        %717 = vmatprep.subr.mxu0 0.0
        %718 = vmatpush1.msra.mxu0 0.0
        %719 = vmatprep.subr.mxu0 0.0
        %720 = vmatpush1.msra.mxu0 0.0
        %721 = vmatprep.subr.mxu0 0.0
        %722 = vmatpush1.msra.mxu0 0.0
        %723 = vmatprep.subr.mxu0 0.0
        %724 = vmatpush1.msra.mxu0 0.0
        %725 = vmatprep.subr.mxu0 0.0
        %726 = vmatpush1.msra.mxu0 0.0
        %727 = vmatprep.subr.mxu0 0.0
        %728 = vmatpush1.msra.mxu0 0.0
        %729 = vmatprep.subr.mxu0 0.0
        %730 = vmatpush1.msra.mxu0 %v587
        %731 = vmatprep.subr.mxu0 0.0
        %732 = vmatpush1.msra.mxu0 %v586
        %733 = vmatprep.subr.mxu0 0.0
        %734 = vmatpush2.msra.mxu0 0.0
        %735 = vmatprep.subr.mxu0 0.0
        %736 = vmatpush2.msra.mxu0 0.0
        %737 = vmatprep.subr.mxu0 0.0
        %738 = vmatpush2.msra.mxu0 0.0
        %739 = vmatprep.subr.mxu0 0.0
        %740 = vmatpush2.msra.mxu0 0.0
        %741 = vmatprep.subr.mxu0 0.0
        %742 = vmatpush2.msra.mxu0 0.0
        %743 = vmatprep.subr.mxu0 0.0
        %744 = vmatpush2.msra.mxu0 0.0
        %745 = vmatprep.subr.mxu0 0.0
        %746 = vmatpush2.msra.mxu0 0.0
        %747 = vmatprep.subr.mxu0 0.0
        %748 = vmatpush2.msra.mxu0 0.0
        %749 = vmatprep.subr.mxu0 0.0
        %750 = vmatpush2.msra.mxu0 0.0
        %751 = vmatprep.subr.mxu0 0.0
        %752 = vmatpush2.msra.mxu0 0.0
        %753 = vmatprep.subr.mxu0 0.0
        %754 = vmatpush2.msra.mxu0 0.0
        %755 = vmatprep.subr.mxu0 0.0
        %756 = vmatpush2.msra.mxu0 0.0
        %757 = vmatprep.subr.mxu0 0.0
        %758 = vmatpush2.msra.mxu0 0.0
        %759 = vmatprep.subr.mxu0 0.0
        %760 = vmatpush2.msra.mxu0 0.0
        %761 = vmatprep.subr.mxu0 0.0
        %762 = vmatpush2.msra.mxu0 0.0
        %763 = vmatprep.subr.mxu0 0.0
        %764 = vmatpush2.msra.mxu0 0.0
        %765 = vmatprep.mubr.f32.mxu0 0.0
        %766 = vmatmul.mubr.f32.gmra.mxu0 %v690
        %v767 = vpop.f32.mrf.mxu0
        %v768 = vadd.f32 %v671, %v767
        %v769 = vpop.f32.mrf.mxu0
        %770 = vmatprep.mubr.f32.mxu0 0.0
        %771 = vmatmul.mubr.f32.gmra.mxu0 %v693
        %v772 = vpop.f32.mrf.mxu0
        %v773 = vadd.f32 %v676, %v772
        %v774 = vpop.f32.mrf.mxu0
        %775 = vmatprep.mubr.f32.mxu0 0.0
        %776 = vmatmul.mubr.f32.gmra.mxu0 %v696
        %v777 = vpop.f32.mrf.mxu0
        %v778 = vadd.f32 %v681, %v777
        %v779 = vpop.f32.mrf.mxu0
        %780 = vmatprep.mubr.f32.mxu0 0.0
        %781 = vmatmul.mubr.f32.gmra.mxu0 %v699
        %v782 = vpop.f32.mrf.mxu0
        %v783 = vadd.f32 %v686, %v782
        %v784 = vpop.f32.mrf.mxu0
        %785 = vdwg.mxu0
        %s786 = scalar_lea.vmem %s1, 32
        %v787 = vld [vmem:[%s786] sm:$0xff]
        %v788 = vld [vmem:[%s786 + $0x8] sm:$0xff]
        %v790 = vsel %vm591, %v582, 0
        %v793 = vsel %vm591, %v583, 0
        %v796 = vsel %vm591, %v584, 0
        %v799 = vsel %vm591, %v585, 0
        %801 = vmatprep.subr.mxu0 0.0
        %802 = vmatpush1.msra.mxu0 0.0
        %803 = vmatprep.subr.mxu0 0.0
        %804 = vmatpush1.msra.mxu0 0.0
        %805 = vmatprep.subr.mxu0 0.0
        %806 = vmatpush1.msra.mxu0 0.0
        %807 = vmatprep.subr.mxu0 0.0
        %808 = vmatpush1.msra.mxu0 0.0
        %809 = vmatprep.subr.mxu0 0.0
        %810 = vmatpush1.msra.mxu0 0.0
        %811 = vmatprep.subr.mxu0 0.0
        %812 = vmatpush1.msra.mxu0 0.0
        %813 = vmatprep.subr.mxu0 0.0
        %814 = vmatpush1.msra.mxu0 0.0
        %815 = vmatprep.subr.mxu0 0.0
        %816 = vmatpush1.msra.mxu0 0.0
        %817 = vmatprep.subr.mxu0 0.0
        %818 = vmatpush1.msra.mxu0 0.0
        %819 = vmatprep.subr.mxu0 0.0
        %820 = vmatpush1.msra.mxu0 0.0
        %821 = vmatprep.subr.mxu0 0.0
        %822 = vmatpush1.msra.mxu0 0.0
        %823 = vmatprep.subr.mxu0 0.0
        %824 = vmatpush1.msra.mxu0 0.0
        %825 = vmatprep.subr.mxu0 0.0
        %826 = vmatpush1.msra.mxu0 0.0
        %827 = vmatprep.subr.mxu0 0.0
        %828 = vmatpush1.msra.mxu0 0.0
        %829 = vmatprep.subr.mxu0 0.0
        %830 = vmatpush1.msra.mxu0 %v788
        %831 = vmatprep.subr.mxu0 0.0
        %832 = vmatpush1.msra.mxu0 %v787
        %833 = vmatprep.subr.mxu0 0.0
        %834 = vmatpush2.msra.mxu0 0.0
        %835 = vmatprep.subr.mxu0 0.0
        %836 = vmatpush2.msra.mxu0 0.0
        %837 = vmatprep.subr.mxu0 0.0
        %838 = vmatpush2.msra.mxu0 0.0
        %839 = vmatprep.subr.mxu0 0.0
        %840 = vmatpush2.msra.mxu0 0.0
        %841 = vmatprep.subr.mxu0 0.0
        %842 = vmatpush2.msra.mxu0 0.0
        %843 = vmatprep.subr.mxu0 0.0
        %844 = vmatpush2.msra.mxu0 0.0
        %845 = vmatprep.subr.mxu0 0.0
        %846 = vmatpush2.msra.mxu0 0.0
        %847 = vmatprep.subr.mxu0 0.0
        %848 = vmatpush2.msra.mxu0 0.0
        %849 = vmatprep.subr.mxu0 0.0
        %850 = vmatpush2.msra.mxu0 0.0
        %851 = vmatprep.subr.mxu0 0.0
        %852 = vmatpush2.msra.mxu0 0.0
        %853 = vmatprep.subr.mxu0 0.0
        %854 = vmatpush2.msra.mxu0 0.0
        %855 = vmatprep.subr.mxu0 0.0
        %856 = vmatpush2.msra.mxu0 0.0
        %857 = vmatprep.subr.mxu0 0.0
        %858 = vmatpush2.msra.mxu0 0.0
        %859 = vmatprep.subr.mxu0 0.0
        %860 = vmatpush2.msra.mxu0 0.0
        %861 = vmatprep.subr.mxu0 0.0
        %862 = vmatpush2.msra.mxu0 0.0
        %863 = vmatprep.subr.mxu0 0.0
        %864 = vmatpush2.msra.mxu0 0.0
        %865 = vmatprep.mubr.f32.mxu0 0.0
        %866 = vmatmul.mubr.f32.gmra.mxu0 %v790
        %v867 = vpop.f32.mrf.mxu0
        %v868 = vadd.f32 0.0, %v867
        %v869 = vpop.f32.mrf.mxu0
        %870 = vmatprep.mubr.f32.mxu0 0.0
        %871 = vmatmul.mubr.f32.gmra.mxu0 %v793
        %v872 = vpop.f32.mrf.mxu0
        %v873 = vadd.f32 0.0, %v872
        %v874 = vpop.f32.mrf.mxu0
        %875 = vmatprep.mubr.f32.mxu0 0.0
        %876 = vmatmul.mubr.f32.gmra.mxu0 %v796
        %v877 = vpop.f32.mrf.mxu0
        %v878 = vadd.f32 0.0, %v877
        %v879 = vpop.f32.mrf.mxu0
        %880 = vmatprep.mubr.f32.mxu0 0.0
        %881 = vmatmul.mubr.f32.gmra.mxu0 %v799
        %v882 = vpop.f32.mrf.mxu0
        %v883 = vadd.f32 0.0, %v882
        %v884 = vpop.f32.mrf.mxu0
        %885 = vdwg.mxu0
        %v886 = vadd.f32 %v768, %v868
        %v887 = vadd.f32 %v773, %v873
        %v888 = vadd.f32 %v778, %v878
        %v889 = vadd.f32 %v783, %v883
        %v890 = vld [vmem:[#allocation2] sm:$0x1]
        %v892 = vlaneseq
        %v893 = vshrl.u32 %v892, 7
        %v894 = vsub.s32 0, %v893
        %v895 = vrot.slane %v890, %v894
        %v897 = vmul.f32 %v886, %v895
        %v898 = vmul.f32 %v887, %v895
        %v899 = vmul.f32 %v888, %v895
        %v900 = vmul.f32 %v889, %v895
        %v901 = vld [vmem:[#allocation5] sm:$0x1]
        %v903 = vlaneseq
        %v904 = vshrl.u32 %v903, 7
        %v905 = vsub.s32 0, %v904
        %v906 = vrot.slane %v901, %v905
        %v908 = vadd.f32 %v897, %v906
        %v909 = vadd.f32 %v898, %v906
        %v910 = vadd.f32 %v899, %v906
        %v911 = vadd.f32 %v900, %v906
        %v912 = vmax.f32 %v908, 0.0
        %v913 = vmax.f32 %v909, 0.0
        %v914 = vmax.f32 %v910, 0.0
        %v915 = vmax.f32 %v911, 0.0
        %v916 = vmin.f32 %v912, 6.0
        %v917 = vmin.f32 %v913, 6.0
        %v918 = vmin.f32 %v914, 6.0
        %v919 = vmin.f32 %v915, 6.0
        %v920 = vld [vmem:[%s2] sm:$0xff]
        %v921 = vld [vmem:[%s2 + $0x8] sm:$0xff]
        %922 = vmatprep.subr.mxu0 0.0
        %923 = vmatpush1.msra.mxu0 0.0
        %924 = vmatprep.subr.mxu0 0.0
        %925 = vmatpush1.msra.mxu0 0.0
        %926 = vmatprep.subr.mxu0 0.0
        %927 = vmatpush1.msra.mxu0 0.0
        %928 = vmatprep.subr.mxu0 0.0
        %929 = vmatpush1.msra.mxu0 0.0
        %930 = vmatprep.subr.mxu0 0.0
        %931 = vmatpush1.msra.mxu0 0.0
        %932 = vmatprep.subr.mxu0 0.0
        %933 = vmatpush1.msra.mxu0 0.0
        %934 = vmatprep.subr.mxu0 0.0
        %935 = vmatpush1.msra.mxu0 0.0
        %936 = vmatprep.subr.mxu0 0.0
        %937 = vmatpush1.msra.mxu0 0.0
        %938 = vmatprep.subr.mxu0 0.0
        %939 = vmatpush1.msra.mxu0 0.0
        %940 = vmatprep.subr.mxu0 0.0
        %941 = vmatpush1.msra.mxu0 0.0
        %942 = vmatprep.subr.mxu0 0.0
        %943 = vmatpush1.msra.mxu0 0.0
        %944 = vmatprep.subr.mxu0 0.0
        %945 = vmatpush1.msra.mxu0 0.0
        %946 = vmatprep.subr.mxu0 0.0
        %947 = vmatpush1.msra.mxu0 0.0
        %948 = vmatprep.subr.mxu0 0.0
        %949 = vmatpush1.msra.mxu0 0.0
        %950 = vmatprep.subr.mxu0 0.0
        %951 = vmatpush1.msra.mxu0 %v921
        %952 = vmatprep.subr.mxu0 0.0
        %953 = vmatpush1.msra.mxu0 %v920
        %954 = vmatprep.subr.mxu0 0.0
        %955 = vmatpush2.msra.mxu0 0.0
        %956 = vmatprep.subr.mxu0 0.0
        %957 = vmatpush2.msra.mxu0 0.0
        %958 = vmatprep.subr.mxu0 0.0
        %959 = vmatpush2.msra.mxu0 0.0
        %960 = vmatprep.subr.mxu0 0.0
        %961 = vmatpush2.msra.mxu0 0.0
        %962 = vmatprep.subr.mxu0 0.0
        %963 = vmatpush2.msra.mxu0 0.0
        %964 = vmatprep.subr.mxu0 0.0
        %965 = vmatpush2.msra.mxu0 0.0
        %966 = vmatprep.subr.mxu0 0.0
        %967 = vmatpush2.msra.mxu0 0.0
        %968 = vmatprep.subr.mxu0 0.0
        %969 = vmatpush2.msra.mxu0 0.0
        %970 = vmatprep.subr.mxu0 0.0
        %971 = vmatpush2.msra.mxu0 0.0
        %972 = vmatprep.subr.mxu0 0.0
        %973 = vmatpush2.msra.mxu0 0.0
        %974 = vmatprep.subr.mxu0 0.0
        %975 = vmatpush2.msra.mxu0 0.0
        %976 = vmatprep.subr.mxu0 0.0
        %977 = vmatpush2.msra.mxu0 0.0
        %978 = vmatprep.subr.mxu0 0.0
        %979 = vmatpush2.msra.mxu0 0.0
        %980 = vmatprep.subr.mxu0 0.0
        %981 = vmatpush2.msra.mxu0 0.0
        %982 = vmatprep.subr.mxu0 0.0
        %983 = vmatpush2.msra.mxu0 0.0
        %984 = vmatprep.subr.mxu0 0.0
        %985 = vmatpush2.msra.mxu0 0.0
        %986 = vmatprep.mubr.f32.mxu0 0.0
        %987 = vmatmul.mubr.f32.gmra.mxu0 %v593
        %v988 = vpop.f32.mrf.mxu0
        %v989 = vadd.f32 0.0, %v988
        %v990 = vpop.f32.mrf.mxu0
        %991 = vmatprep.mubr.f32.mxu0 0.0
        %992 = vmatmul.mubr.f32.gmra.mxu0 %v596
        %v993 = vpop.f32.mrf.mxu0
        %v994 = vadd.f32 0.0, %v993
        %v995 = vpop.f32.mrf.mxu0
        %996 = vmatprep.mubr.f32.mxu0 0.0
        %997 = vmatmul.mubr.f32.gmra.mxu0 %v599
        %v998 = vpop.f32.mrf.mxu0
        %v999 = vadd.f32 0.0, %v998
        %v1000 = vpop.f32.mrf.mxu0
        %1001 = vmatprep.mubr.f32.mxu0 0.0
        %1002 = vmatmul.mubr.f32.gmra.mxu0 %v602
        %v1003 = vpop.f32.mrf.mxu0
        %v1004 = vadd.f32 0.0, %v1003
        %v1005 = vpop.f32.mrf.mxu0
        %1006 = vdwg.mxu0
        %v1007 = vld [vmem:[%s5] sm:$0x1]
        %v1009 = vlaneseq
        %v1010 = vshrl.u32 %v1009, 7
        %v1011 = vsub.s32 0, %v1010
        %v1012 = vrot.slane %v1007, %v1011
        %v1014 = vmul.f32 %v989, %v1012
        %v1015 = vmul.f32 %v994, %v1012
        %v1016 = vmul.f32 %v999, %v1012
        %v1017 = vmul.f32 %v1004, %v1012
        %v1018 = vld [vmem:[%s6] sm:$0x1]
        %v1020 = vlaneseq
        %v1021 = vshrl.u32 %v1020, 7
        %v1022 = vsub.s32 0, %v1021
        %v1023 = vrot.slane %v1018, %v1022
        %v1025 = vadd.f32 %v1014, %v1023
        %v1026 = vadd.f32 %v1015, %v1023
        %v1027 = vadd.f32 %v1016, %v1023
        %v1028 = vadd.f32 %v1017, %v1023
        %v1029 = vrot.slane %v916, 7
        %v1030 = vrot.slane %v917, 7
        %v1031 = vrot.slane %v918, 7
        %v1032 = vrot.slane %v919, 7
        %v1033 = vsel %vm560, %v1031, %v1032
        %v1034 = vsel %vm560, %v1030, %v1031
        %v1035 = vsel %vm560, %v1029, %v1030
        %v1036 = vsel %vm560, %v1032, %v1029
        %v1037 = vsel %vm552, 0.0, %v1036
        %v1038 = vsel %vm553, 0.0, %v1035
        %v1039 = vsel %vm554, 0.0, %v1034
        %v1040 = vsel %vm555, 0.0, %v1033
        %v1041 = vrot.slane %v916, 1
        %v1042 = vrot.slane %v917, 1
        %v1043 = vrot.slane %v918, 1
        %v1044 = vrot.slane %v919, 1
        %v1045 = vsel %vm577, %v1043, %v1044
        %v1046 = vsel %vm577, %v1042, %v1043
        %v1047 = vsel %vm577, %v1041, %v1042
        %v1048 = vsel %vm577, %v1044, %v1041
        %v1049 = vsel %vm569, 0.0, %v1047
        %v1050 = vsel %vm570, 0.0, %v1046
        %v1051 = vsel %vm571, 0.0, %v1045
        %v1052 = vsel %vm572, 0.0, %v1048
        %v1053 = vld [vmem:[%s7] sm:$0xff]
        %v1054 = vld [vmem:[%s7 + $0x8] sm:$0xff]
        %v1055 = vld [vmem:[%s7 + $0x10] sm:$0xff]
        %v1056 = vld [vmem:[%s7 + $0x18] sm:$0xff]
        %s1057 = scalar_lea.vmem %s7, 32
        %v1058 = vld [vmem:[%s1057] sm:$0xff]
        %v1059 = vld [vmem:[%s1057 + $0x8] sm:$0xff]
        %v1060 = vld [vmem:[%s1057 + $0x10] sm:$0xff]
        %v1061 = vld [vmem:[%s1057 + $0x18] sm:$0xff]
        %vm1062 = vcmask 261120
        %v1064 = vsel %vm1062, %v916, 0
        %v1067 = vsel %vm1062, %v917, 0
        %v1070 = vsel %vm1062, %v918, 0
        %v1073 = vsel %vm1062, %v919, 0
        %1075 = vmatprep.subr.mxu0 0.0
        %1076 = vmatpush1.msra.mxu0 0.0
        %1077 = vmatprep.subr.mxu0 0.0
        %1078 = vmatpush1.msra.mxu0 0.0
        %1079 = vmatprep.subr.mxu0 0.0
        %1080 = vmatpush1.msra.mxu0 0.0
        %1081 = vmatprep.subr.mxu0 0.0
        %1082 = vmatpush1.msra.mxu0 0.0
        %1083 = vmatprep.subr.mxu0 0.0
        %1084 = vmatpush1.msra.mxu0 0.0
        %1085 = vmatprep.subr.mxu0 0.0
        %1086 = vmatpush1.msra.mxu0 0.0
        %1087 = vmatprep.subr.mxu0 0.0
        %1088 = vmatpush1.msra.mxu0 0.0
        %1089 = vmatprep.subr.mxu0 0.0
        %1090 = vmatpush1.msra.mxu0 0.0
        %1091 = vmatprep.subr.mxu0 0.0
        %1092 = vmatpush1.msra.mxu0 0.0
        %1093 = vmatprep.subr.mxu0 0.0
        %1094 = vmatpush1.msra.mxu0 0.0
        %1095 = vmatprep.subr.mxu0 0.0
        %1096 = vmatpush1.msra.mxu0 0.0
        %1097 = vmatprep.subr.mxu0 0.0
        %1098 = vmatpush1.msra.mxu0 0.0
        %1099 = vmatprep.subr.mxu0 0.0
        %1100 = vmatpush1.msra.mxu0 %v1061
        %1101 = vmatprep.subr.mxu0 0.0
        %1102 = vmatpush1.msra.mxu0 %v1060
        %1103 = vmatprep.subr.mxu0 0.0
        %1104 = vmatpush1.msra.mxu0 %v1059
        %1105 = vmatprep.subr.mxu0 0.0
        %1106 = vmatpush1.msra.mxu0 %v1058
        %1107 = vmatprep.subr.mxu0 0.0
        %1108 = vmatpush2.msra.mxu0 0.0
        %1109 = vmatprep.subr.mxu0 0.0
        %1110 = vmatpush2.msra.mxu0 0.0
        %1111 = vmatprep.subr.mxu0 0.0
        %1112 = vmatpush2.msra.mxu0 0.0
        %1113 = vmatprep.subr.mxu0 0.0
        %1114 = vmatpush2.msra.mxu0 0.0
        %1115 = vmatprep.subr.mxu0 0.0
        %1116 = vmatpush2.msra.mxu0 0.0
        %1117 = vmatprep.subr.mxu0 0.0
        %1118 = vmatpush2.msra.mxu0 0.0
        %1119 = vmatprep.subr.mxu0 0.0
        %1120 = vmatpush2.msra.mxu0 0.0
        %1121 = vmatprep.subr.mxu0 0.0
        %1122 = vmatpush2.msra.mxu0 0.0
        %1123 = vmatprep.subr.mxu0 0.0
        %1124 = vmatpush2.msra.mxu0 0.0
        %1125 = vmatprep.subr.mxu0 0.0
        %1126 = vmatpush2.msra.mxu0 0.0
        %1127 = vmatprep.subr.mxu0 0.0
        %1128 = vmatpush2.msra.mxu0 0.0
        %1129 = vmatprep.subr.mxu0 0.0
        %1130 = vmatpush2.msra.mxu0 0.0
        %1131 = vmatprep.subr.mxu0 0.0
        %1132 = vmatpush2.msra.mxu0 0.0
        %1133 = vmatprep.subr.mxu0 0.0
        %1134 = vmatpush2.msra.mxu0 0.0
        %1135 = vmatprep.subr.mxu0 0.0
        %1136 = vmatpush2.msra.mxu0 0.0
        %1137 = vmatprep.subr.mxu0 0.0
        %1138 = vmatpush2.msra.mxu0 0.0
        %1139 = vmatprep.mubr.f32.mxu0 0.0
        %1140 = vmatmul.mubr.f32.gmra.mxu0 %v1064
        %v1141 = vpop.f32.mrf.mxu0
        %v1142 = vadd.f32 0.0, %v1141
        %v1143 = vpop.f32.mrf.mxu0
        %1144 = vmatprep.mubr.f32.mxu0 0.0
        %1145 = vmatmul.mubr.f32.gmra.mxu0 %v1067
        %v1146 = vpop.f32.mrf.mxu0
        %v1147 = vadd.f32 0.0, %v1146
        %v1148 = vpop.f32.mrf.mxu0
        %1149 = vmatprep.mubr.f32.mxu0 0.0
        %1150 = vmatmul.mubr.f32.gmra.mxu0 %v1070
        %v1151 = vpop.f32.mrf.mxu0
        %v1152 = vadd.f32 0.0, %v1151
        %v1153 = vpop.f32.mrf.mxu0
        %1154 = vmatprep.mubr.f32.mxu0 0.0
        %1155 = vmatmul.mubr.f32.gmra.mxu0 %v1073
        %v1156 = vpop.f32.mrf.mxu0
        %v1157 = vadd.f32 0.0, %v1156
        %v1158 = vpop.f32.mrf.mxu0
        %1159 = vdwg.mxu0
        %v1161 = vsel %vm1062, %v1037, 0
        %v1164 = vsel %vm1062, %v1038, 0
        %v1167 = vsel %vm1062, %v1039, 0
        %v1170 = vsel %vm1062, %v1040, 0
        %1172 = vmatprep.subr.mxu0 0.0
        %1173 = vmatpush1.msra.mxu0 0.0
        %1174 = vmatprep.subr.mxu0 0.0
        %1175 = vmatpush1.msra.mxu0 0.0
        %1176 = vmatprep.subr.mxu0 0.0
        %1177 = vmatpush1.msra.mxu0 0.0
        %1178 = vmatprep.subr.mxu0 0.0
        %1179 = vmatpush1.msra.mxu0 0.0
        %1180 = vmatprep.subr.mxu0 0.0
        %1181 = vmatpush1.msra.mxu0 0.0
        %1182 = vmatprep.subr.mxu0 0.0
        %1183 = vmatpush1.msra.mxu0 0.0
        %1184 = vmatprep.subr.mxu0 0.0
        %1185 = vmatpush1.msra.mxu0 0.0
        %1186 = vmatprep.subr.mxu0 0.0
        %1187 = vmatpush1.msra.mxu0 0.0
        %1188 = vmatprep.subr.mxu0 0.0
        %1189 = vmatpush1.msra.mxu0 0.0
        %1190 = vmatprep.subr.mxu0 0.0
        %1191 = vmatpush1.msra.mxu0 0.0
        %1192 = vmatprep.subr.mxu0 0.0
        %1193 = vmatpush1.msra.mxu0 0.0
        %1194 = vmatprep.subr.mxu0 0.0
        %1195 = vmatpush1.msra.mxu0 0.0
        %1196 = vmatprep.subr.mxu0 0.0
        %1197 = vmatpush1.msra.mxu0 %v1056
        %1198 = vmatprep.subr.mxu0 0.0
        %1199 = vmatpush1.msra.mxu0 %v1055
        %1200 = vmatprep.subr.mxu0 0.0
        %1201 = vmatpush1.msra.mxu0 %v1054
        %1202 = vmatprep.subr.mxu0 0.0
        %1203 = vmatpush1.msra.mxu0 %v1053
        %1204 = vmatprep.subr.mxu0 0.0
        %1205 = vmatpush2.msra.mxu0 0.0
        %1206 = vmatprep.subr.mxu0 0.0
        %1207 = vmatpush2.msra.mxu0 0.0
        %1208 = vmatprep.subr.mxu0 0.0
        %1209 = vmatpush2.msra.mxu0 0.0
        %1210 = vmatprep.subr.mxu0 0.0
        %1211 = vmatpush2.msra.mxu0 0.0
        %1212 = vmatprep.subr.mxu0 0.0
        %1213 = vmatpush2.msra.mxu0 0.0
        %1214 = vmatprep.subr.mxu0 0.0
        %1215 = vmatpush2.msra.mxu0 0.0
        %1216 = vmatprep.subr.mxu0 0.0
        %1217 = vmatpush2.msra.mxu0 0.0
        %1218 = vmatprep.subr.mxu0 0.0
        %1219 = vmatpush2.msra.mxu0 0.0
        %1220 = vmatprep.subr.mxu0 0.0
        %1221 = vmatpush2.msra.mxu0 0.0
        %1222 = vmatprep.subr.mxu0 0.0
        %1223 = vmatpush2.msra.mxu0 0.0
        %1224 = vmatprep.subr.mxu0 0.0
        %1225 = vmatpush2.msra.mxu0 0.0
        %1226 = vmatprep.subr.mxu0 0.0
        %1227 = vmatpush2.msra.mxu0 0.0
        %1228 = vmatprep.subr.mxu0 0.0
        %1229 = vmatpush2.msra.mxu0 0.0
        %1230 = vmatprep.subr.mxu0 0.0
        %1231 = vmatpush2.msra.mxu0 0.0
        %1232 = vmatprep.subr.mxu0 0.0
        %1233 = vmatpush2.msra.mxu0 0.0
        %1234 = vmatprep.subr.mxu0 0.0
        %1235 = vmatpush2.msra.mxu0 0.0
        %1236 = vmatprep.mubr.f32.mxu0 0.0
        %1237 = vmatmul.mubr.f32.gmra.mxu0 %v1161
        %v1238 = vpop.f32.mrf.mxu0
        %v1239 = vadd.f32 %v1142, %v1238
        %v1240 = vpop.f32.mrf.mxu0
        %1241 = vmatprep.mubr.f32.mxu0 0.0
        %1242 = vmatmul.mubr.f32.gmra.mxu0 %v1164
        %v1243 = vpop.f32.mrf.mxu0
        %v1244 = vadd.f32 %v1147, %v1243
        %v1245 = vpop.f32.mrf.mxu0
        %1246 = vmatprep.mubr.f32.mxu0 0.0
        %1247 = vmatmul.mubr.f32.gmra.mxu0 %v1167
        %v1248 = vpop.f32.mrf.mxu0
        %v1249 = vadd.f32 %v1152, %v1248
        %v1250 = vpop.f32.mrf.mxu0
        %1251 = vmatprep.mubr.f32.mxu0 0.0
        %1252 = vmatmul.mubr.f32.gmra.mxu0 %v1170
        %v1253 = vpop.f32.mrf.mxu0
        %v1254 = vadd.f32 %v1157, %v1253
        %v1255 = vpop.f32.mrf.mxu0
        %1256 = vdwg.mxu0
        %s1257 = scalar_lea.vmem %s7, 64
        %v1258 = vld [vmem:[%s1257] sm:$0xff]
        %v1259 = vld [vmem:[%s1257 + $0x8] sm:$0xff]
        %v1260 = vld [vmem:[%s1257 + $0x10] sm:$0xff]
        %v1261 = vld [vmem:[%s1257 + $0x18] sm:$0xff]
        %v1263 = vsel %vm1062, %v1049, 0
        %v1266 = vsel %vm1062, %v1050, 0
        %v1269 = vsel %vm1062, %v1051, 0
        %v1272 = vsel %vm1062, %v1052, 0
        %1274 = vmatprep.subr.mxu0 0.0
        %1275 = vmatpush1.msra.mxu0 0.0
        %1276 = vmatprep.subr.mxu0 0.0
        %1277 = vmatpush1.msra.mxu0 0.0
        %1278 = vmatprep.subr.mxu0 0.0
        %1279 = vmatpush1.msra.mxu0 0.0
        %1280 = vmatprep.subr.mxu0 0.0
        %1281 = vmatpush1.msra.mxu0 0.0
        %1282 = vmatprep.subr.mxu0 0.0
        %1283 = vmatpush1.msra.mxu0 0.0
        %1284 = vmatprep.subr.mxu0 0.0
        %1285 = vmatpush1.msra.mxu0 0.0
        %1286 = vmatprep.subr.mxu0 0.0
        %1287 = vmatpush1.msra.mxu0 0.0
        %1288 = vmatprep.subr.mxu0 0.0
        %1289 = vmatpush1.msra.mxu0 0.0
        %1290 = vmatprep.subr.mxu0 0.0
        %1291 = vmatpush1.msra.mxu0 0.0
        %1292 = vmatprep.subr.mxu0 0.0
        %1293 = vmatpush1.msra.mxu0 0.0
        %1294 = vmatprep.subr.mxu0 0.0
        %1295 = vmatpush1.msra.mxu0 0.0
        %1296 = vmatprep.subr.mxu0 0.0
        %1297 = vmatpush1.msra.mxu0 0.0
        %1298 = vmatprep.subr.mxu0 0.0
        %1299 = vmatpush1.msra.mxu0 %v1261
        %1300 = vmatprep.subr.mxu0 0.0
        %1301 = vmatpush1.msra.mxu0 %v1260
        %1302 = vmatprep.subr.mxu0 0.0
        %1303 = vmatpush1.msra.mxu0 %v1259
        %1304 = vmatprep.subr.mxu0 0.0
        %1305 = vmatpush1.msra.mxu0 %v1258
        %1306 = vmatprep.subr.mxu0 0.0
        %1307 = vmatpush2.msra.mxu0 0.0
        %1308 = vmatprep.subr.mxu0 0.0
        %1309 = vmatpush2.msra.mxu0 0.0
        %1310 = vmatprep.subr.mxu0 0.0
        %1311 = vmatpush2.msra.mxu0 0.0
        %1312 = vmatprep.subr.mxu0 0.0
        %1313 = vmatpush2.msra.mxu0 0.0
        %1314 = vmatprep.subr.mxu0 0.0
        %1315 = vmatpush2.msra.mxu0 0.0
        %1316 = vmatprep.subr.mxu0 0.0
        %1317 = vmatpush2.msra.mxu0 0.0
        %1318 = vmatprep.subr.mxu0 0.0
        %1319 = vmatpush2.msra.mxu0 0.0
        %1320 = vmatprep.subr.mxu0 0.0
        %1321 = vmatpush2.msra.mxu0 0.0
        %1322 = vmatprep.subr.mxu0 0.0
        %1323 = vmatpush2.msra.mxu0 0.0
        %1324 = vmatprep.subr.mxu0 0.0
        %1325 = vmatpush2.msra.mxu0 0.0
        %1326 = vmatprep.subr.mxu0 0.0
        %1327 = vmatpush2.msra.mxu0 0.0
        %1328 = vmatprep.subr.mxu0 0.0
        %1329 = vmatpush2.msra.mxu0 0.0
        %1330 = vmatprep.subr.mxu0 0.0
        %1331 = vmatpush2.msra.mxu0 0.0
        %1332 = vmatprep.subr.mxu0 0.0
        %1333 = vmatpush2.msra.mxu0 0.0
        %1334 = vmatprep.subr.mxu0 0.0
        %1335 = vmatpush2.msra.mxu0 0.0
        %1336 = vmatprep.subr.mxu0 0.0
        %1337 = vmatpush2.msra.mxu0 0.0
        %1338 = vmatprep.mubr.f32.mxu0 0.0
        %1339 = vmatmul.mubr.f32.gmra.mxu0 %v1263
        %v1340 = vpop.f32.mrf.mxu0
        %v1341 = vadd.f32 0.0, %v1340
        %v1342 = vpop.f32.mrf.mxu0
        %1343 = vmatprep.mubr.f32.mxu0 0.0
        %1344 = vmatmul.mubr.f32.gmra.mxu0 %v1266
        %v1345 = vpop.f32.mrf.mxu0
        %v1346 = vadd.f32 0.0, %v1345
        %v1347 = vpop.f32.mrf.mxu0
        %1348 = vmatprep.mubr.f32.mxu0 0.0
        %1349 = vmatmul.mubr.f32.gmra.mxu0 %v1269
        %v1350 = vpop.f32.mrf.mxu0
        %v1351 = vadd.f32 0.0, %v1350
        %v1352 = vpop.f32.mrf.mxu0
        %1353 = vmatprep.mubr.f32.mxu0 0.0
        %1354 = vmatmul.mubr.f32.gmra.mxu0 %v1272
        %v1355 = vpop.f32.mrf.mxu0
        %v1356 = vadd.f32 0.0, %v1355
        %v1357 = vpop.f32.mrf.mxu0
        %1358 = vdwg.mxu0
        %v1359 = vadd.f32 %v1239, %v1341
        %v1360 = vadd.f32 %v1244, %v1346
        %v1361 = vadd.f32 %v1249, %v1351
        %v1362 = vadd.f32 %v1254, %v1356
        %v1363 = vld [vmem:[%s8] sm:$0x1]
        %v1365 = vlaneseq
        %v1366 = vshrl.u32 %v1365, 7
        %v1367 = vsub.s32 0, %v1366
        %v1368 = vrot.slane %v1363, %v1367
        %v1370 = vmul.f32 %v1359, %v1368
        %v1371 = vmul.f32 %v1360, %v1368
        %v1372 = vmul.f32 %v1361, %v1368
        %v1373 = vmul.f32 %v1362, %v1368
        %v1374 = vld [vmem:[%s9] sm:$0x1]
        %v1376 = vlaneseq
        %v1377 = vshrl.u32 %v1376, 7
        %v1378 = vsub.s32 0, %v1377
        %v1379 = vrot.slane %v1374, %v1378
        %v1381 = vadd.f32 %v1370, %v1379
        %v1382 = vadd.f32 %v1371, %v1379
        %v1383 = vadd.f32 %v1372, %v1379
        %v1384 = vadd.f32 %v1373, %v1379
        %v1385 = vld [vmem:[%s12] sm:$0x3]
        %v1387 = vsel %vm1062, %v1385, 0
        %1389 = vmatprep.subr.mxu0 0.0
        %1390 = vmatpush1.msra.mxu0 0.0
        %1391 = vmatprep.subr.mxu0 0.0
        %1392 = vmatpush1.msra.mxu0 0.0
        %1393 = vmatprep.subr.mxu0 0.0
        %1394 = vmatpush1.msra.mxu0 0.0
        %1395 = vmatprep.subr.mxu0 0.0
        %1396 = vmatpush1.msra.mxu0 0.0
        %1397 = vmatprep.subr.mxu0 0.0
        %1398 = vmatpush1.msra.mxu0 0.0
        %1399 = vmatprep.subr.mxu0 0.0
        %1400 = vmatpush1.msra.mxu0 0.0
        %1401 = vmatprep.subr.mxu0 0.0
        %1402 = vmatpush1.msra.mxu0 0.0
        %1403 = vmatprep.subr.mxu0 0.0
        %1404 = vmatpush1.msra.mxu0 0.0
        %1405 = vmatprep.subr.mxu0 0.0
        %1406 = vmatpush1.msra.mxu0 0.0
        %1407 = vmatprep.subr.mxu0 0.0
        %1408 = vmatpush1.msra.mxu0 0.0
        %1409 = vmatprep.subr.mxu0 0.0
        %1410 = vmatpush1.msra.mxu0 0.0
        %1411 = vmatprep.subr.mxu0 0.0
        %1412 = vmatpush1.msra.mxu0 0.0
        %1413 = vmatprep.subr.mxu0 0.0
        %1414 = vmatpush1.msra.mxu0 %v1384
        %1415 = vmatprep.subr.mxu0 0.0
        %1416 = vmatpush1.msra.mxu0 %v1383
        %1417 = vmatprep.subr.mxu0 0.0
        %1418 = vmatpush1.msra.mxu0 %v1382
        %1419 = vmatprep.subr.mxu0 0.0
        %1420 = vmatpush1.msra.mxu0 %v1381
        %1421 = vmatprep.subr.mxu0 0.0
        %1422 = vmatpush2.msra.mxu0 0.0
        %1423 = vmatprep.subr.mxu0 0.0
        %1424 = vmatpush2.msra.mxu0 0.0
        %1425 = vmatprep.subr.mxu0 0.0
        %1426 = vmatpush2.msra.mxu0 0.0
        %1427 = vmatprep.subr.mxu0 0.0
        %1428 = vmatpush2.msra.mxu0 0.0
        %1429 = vmatprep.subr.mxu0 0.0
        %1430 = vmatpush2.msra.mxu0 0.0
        %1431 = vmatprep.subr.mxu0 0.0
        %1432 = vmatpush2.msra.mxu0 0.0
        %1433 = vmatprep.subr.mxu0 0.0
        %1434 = vmatpush2.msra.mxu0 0.0
        %1435 = vmatprep.subr.mxu0 0.0
        %1436 = vmatpush2.msra.mxu0 0.0
        %1437 = vmatprep.subr.mxu0 0.0
        %1438 = vmatpush2.msra.mxu0 0.0
        %1439 = vmatprep.subr.mxu0 0.0
        %1440 = vmatpush2.msra.mxu0 0.0
        %1441 = vmatprep.subr.mxu0 0.0
        %1442 = vmatpush2.msra.mxu0 0.0
        %1443 = vmatprep.subr.mxu0 0.0
        %1444 = vmatpush2.msra.mxu0 0.0
        %1445 = vmatprep.subr.mxu0 0.0
        %1446 = vmatpush2.msra.mxu0 0.0
        %1447 = vmatprep.subr.mxu0 0.0
        %1448 = vmatpush2.msra.mxu0 0.0
        %1449 = vmatprep.subr.mxu0 0.0
        %1450 = vmatpush2.msra.mxu0 0.0
        %1451 = vmatprep.subr.mxu0 0.0
        %1452 = vmatpush2.msra.mxu0 0.0
        %1453 = vmatprep.mubr.f32.mxu0 0.0
        %1454 = vmatmul.mubr.f32.gmra.mxu0 %v1387
        %v1455 = vpop.f32.mrf.mxu0
        %v1456 = vadd.f32 0.0, %v1455
        %v1457 = vpop.f32.mrf.mxu0
        %1458 = vdwg.mxu0
        %v1459 = vld [vmem:[%s10] sm:$0xff]
        %v1460 = vld [vmem:[%s10 + $0x8] sm:$0xff]
        %v1461 = vld [vmem:[%s10 + $0x10] sm:$0xff]
        %v1462 = vld [vmem:[%s10 + $0x18] sm:$0xff]
        %v1464 = vsel %vm1062, %v1456, 0
        %1466 = vmatprep.subr.mxu0 0.0
        %1467 = vmatpush1.msra.mxu0 0.0
        %1468 = vmatprep.subr.mxu0 0.0
        %1469 = vmatpush1.msra.mxu0 0.0
        %1470 = vmatprep.subr.mxu0 0.0
        %1471 = vmatpush1.msra.mxu0 0.0
        %1472 = vmatprep.subr.mxu0 0.0
        %1473 = vmatpush1.msra.mxu0 0.0
        %1474 = vmatprep.subr.mxu0 0.0
        %1475 = vmatpush1.msra.mxu0 0.0
        %1476 = vmatprep.subr.mxu0 0.0
        %1477 = vmatpush1.msra.mxu0 0.0
        %1478 = vmatprep.subr.mxu0 0.0
        %1479 = vmatpush1.msra.mxu0 0.0
        %1480 = vmatprep.subr.mxu0 0.0
        %1481 = vmatpush1.msra.mxu0 0.0
        %1482 = vmatprep.subr.mxu0 0.0
        %1483 = vmatpush1.msra.mxu0 0.0
        %1484 = vmatprep.subr.mxu0 0.0
        %1485 = vmatpush1.msra.mxu0 0.0
        %1486 = vmatprep.subr.mxu0 0.0
        %1487 = vmatpush1.msra.mxu0 0.0
        %1488 = vmatprep.subr.mxu0 0.0
        %1489 = vmatpush1.msra.mxu0 0.0
        %1490 = vmatprep.subr.mxu0 0.0
        %1491 = vmatpush1.msra.mxu0 %v1462
        %1492 = vmatprep.subr.mxu0 0.0
        %1493 = vmatpush1.msra.mxu0 %v1461
        %1494 = vmatprep.subr.mxu0 0.0
        %1495 = vmatpush1.msra.mxu0 %v1460
        %1496 = vmatprep.subr.mxu0 0.0
        %1497 = vmatpush1.msra.mxu0 %v1459
        %1498 = vmatprep.subr.mxu0 0.0
        %1499 = vmatpush2.msra.mxu0 0.0
        %1500 = vmatprep.subr.mxu0 0.0
        %1501 = vmatpush2.msra.mxu0 0.0
        %1502 = vmatprep.subr.mxu0 0.0
        %1503 = vmatpush2.msra.mxu0 0.0
        %1504 = vmatprep.subr.mxu0 0.0
        %1505 = vmatpush2.msra.mxu0 0.0
        %1506 = vmatprep.subr.mxu0 0.0
        %1507 = vmatpush2.msra.mxu0 0.0
        %1508 = vmatprep.subr.mxu0 0.0
        %1509 = vmatpush2.msra.mxu0 0.0
        %1510 = vmatprep.subr.mxu0 0.0
        %1511 = vmatpush2.msra.mxu0 0.0
        %1512 = vmatprep.subr.mxu0 0.0
        %1513 = vmatpush2.msra.mxu0 0.0
        %1514 = vmatprep.subr.mxu0 0.0
        %1515 = vmatpush2.msra.mxu0 0.0
        %1516 = vmatprep.subr.mxu0 0.0
        %1517 = vmatpush2.msra.mxu0 0.0
        %1518 = vmatprep.subr.mxu0 0.0
        %1519 = vmatpush2.msra.mxu0 0.0
        %1520 = vmatprep.subr.mxu0 0.0
        %1521 = vmatpush2.msra.mxu0 0.0
        %1522 = vmatprep.subr.mxu0 0.0
        %1523 = vmatpush2.msra.mxu0 0.0
        %1524 = vmatprep.subr.mxu0 0.0
        %1525 = vmatpush2.msra.mxu0 0.0
        %1526 = vmatprep.subr.mxu0 0.0
        %1527 = vmatpush2.msra.mxu0 0.0
        %1528 = vmatprep.subr.mxu0 0.0
        %1529 = vmatpush2.msra.mxu0 0.0
        %1530 = vmatprep.mubr.f32.mxu0 0.0
        %1531 = vmatmul.mubr.f32.gmra.mxu0 %v1464
        %v1532 = vpop.f32.mrf.mxu0
        %v1533 = vadd.f32 0.0, %v1532
        %v1534 = vpop.f32.mrf.mxu0
        %1535 = vdwg.mxu0
        %v1536 = vmax.f32 %v1533, 0.0
        %v1537 = vmin.f32 %v1536, 6.0
        %v1538 = vld [vmem:[%s11] sm:$0x3]
        %vm1539 = vcmask 15360
        %v1541 = vsel %vm1539, %v1537, 0
        %vm1543 = vcmask 1041408
        %v1545 = vsel %vm1543, %v1538, 0
        %1547 = vmatprep.subr.mxu0 0.0
        %1548 = vmatpush1.msra.mxu0 0.0
        %1549 = vmatprep.subr.mxu0 0.0
        %1550 = vmatpush1.msra.mxu0 0.0
        %1551 = vmatprep.subr.mxu0 0.0
        %1552 = vmatpush1.msra.mxu0 0.0
        %1553 = vmatprep.subr.mxu0 0.0
        %1554 = vmatpush1.msra.mxu0 0.0
        %1555 = vmatprep.subr.mxu0 0.0
        %1556 = vmatpush1.msra.mxu0 0.0
        %1557 = vmatprep.subr.mxu0 0.0
        %1558 = vmatpush1.msra.mxu0 0.0
        %1559 = vmatprep.subr.mxu0 0.0
        %1560 = vmatpush1.msra.mxu0 0.0
        %1561 = vmatprep.subr.mxu0 0.0
        %1562 = vmatpush1.msra.mxu0 0.0
        %1563 = vmatprep.subr.mxu0 0.0
        %1564 = vmatpush1.msra.mxu0 0.0
        %1565 = vmatprep.subr.mxu0 0.0
        %1566 = vmatpush1.msra.mxu0 0.0
        %1567 = vmatprep.subr.mxu0 0.0
        %1568 = vmatpush1.msra.mxu0 0.0
        %1569 = vmatprep.subr.mxu0 0.0
        %1570 = vmatpush1.msra.mxu0 0.0
        %1571 = vmatprep.subr.mxu0 0.0
        %1572 = vmatpush1.msra.mxu0 0.0
        %1573 = vmatprep.subr.mxu0 0.0
        %1574 = vmatpush1.msra.mxu0 0.0
        %1575 = vmatprep.subr.mxu0 0.0
        %1576 = vmatpush1.msra.mxu0 0.0
        %1577 = vmatprep.subr.mxu0 0.0
        %1578 = vmatpush1.msra.mxu0 %v1545
        %1579 = vmatprep.subr.mxu0 0.0
        %1580 = vmatpush2.msra.mxu0 0.0
        %1581 = vmatprep.subr.mxu0 0.0
        %1582 = vmatpush2.msra.mxu0 0.0
        %1583 = vmatprep.subr.mxu0 0.0
        %1584 = vmatpush2.msra.mxu0 0.0
        %1585 = vmatprep.subr.mxu0 0.0
        %1586 = vmatpush2.msra.mxu0 0.0
        %1587 = vmatprep.subr.mxu0 0.0
        %1588 = vmatpush2.msra.mxu0 0.0
        %1589 = vmatprep.subr.mxu0 0.0
        %1590 = vmatpush2.msra.mxu0 0.0
        %1591 = vmatprep.subr.mxu0 0.0
        %1592 = vmatpush2.msra.mxu0 0.0
        %1593 = vmatprep.subr.mxu0 0.0
        %1594 = vmatpush2.msra.mxu0 0.0
        %1595 = vmatprep.subr.mxu0 0.0
        %1596 = vmatpush2.msra.mxu0 0.0
        %1597 = vmatprep.subr.mxu0 0.0
        %1598 = vmatpush2.msra.mxu0 0.0
        %1599 = vmatprep.subr.mxu0 0.0
        %1600 = vmatpush2.msra.mxu0 0.0
        %1601 = vmatprep.subr.mxu0 0.0
        %1602 = vmatpush2.msra.mxu0 0.0
        %1603 = vmatprep.subr.mxu0 0.0
        %1604 = vmatpush2.msra.mxu0 0.0
        %1605 = vmatprep.subr.mxu0 0.0
        %1606 = vmatpush2.msra.mxu0 0.0
        %1607 = vmatprep.subr.mxu0 0.0
        %1608 = vmatpush2.msra.mxu0 0.0
        %1609 = vmatprep.subr.mxu0 0.0
        %1610 = vmatpush2.msra.mxu0 0.0
        %1611 = vmatprep.mubr.f32.mxu0 0.0
        %1612 = vmatmul.mubr.f32.gmra.mxu0 %v1541
        %v1613 = vpop.f32.mrf.mxu0
        %v1614 = vadd.f32 0.0, %v1613
        %v1615 = vpop.f32.mrf.mxu0
        %1616 = vdwg.mxu0
        %v1617 = vxor.u32 %v1614, 2147483648
        %v1618 = vmul.f32 %v1617, 1.442695
        %v1619 = vpow.pop %v1618
        %v1620 = vadd.f32 %v1619, 1.0
        %v1621 = vrcp.pop %v1620
        %v1622 = vmul.f32 1.0, %v1621
        %v1623 = vld [vmem:[%s13] sm:$0xff]
        %v1624 = vld [vmem:[%s13 + $0x8] sm:$0xff]
        %v1625 = vld [vmem:[%s13 + $0x10] sm:$0xff]
        %v1626 = vld [vmem:[%s13 + $0x18] sm:$0xff]
        %v1628 = vsel %vm1539, %v1623, 0
        %v1631 = vsel %vm1539, %v1624, 0
        %v1634 = vsel %vm1539, %v1625, 0
        %v1637 = vsel %vm1539, %v1626, 0
        %v1640 = vsel %vm1543, %v1622, 0
        %1642 = vmatprep.subr.mxu0 0.0
        %1643 = vmatpush1.msra.mxu0 0.0
        %1644 = vmatprep.subr.mxu0 0.0
        %1645 = vmatpush1.msra.mxu0 0.0
        %1646 = vmatprep.subr.mxu0 0.0
        %1647 = vmatpush1.msra.mxu0 0.0
        %1648 = vmatprep.subr.mxu0 0.0
        %1649 = vmatpush1.msra.mxu0 0.0
        %1650 = vmatprep.subr.mxu0 0.0
        %1651 = vmatpush1.msra.mxu0 0.0
        %1652 = vmatprep.subr.mxu0 0.0
        %1653 = vmatpush1.msra.mxu0 0.0
        %1654 = vmatprep.subr.mxu0 0.0
        %1655 = vmatpush1.msra.mxu0 0.0
        %1656 = vmatprep.subr.mxu0 0.0
        %1657 = vmatpush1.msra.mxu0 0.0
        %1658 = vmatprep.subr.mxu0 0.0
        %1659 = vmatpush1.msra.mxu0 0.0
        %1660 = vmatprep.subr.mxu0 0.0
        %1661 = vmatpush1.msra.mxu0 0.0
        %1662 = vmatprep.subr.mxu0 0.0
        %1663 = vmatpush1.msra.mxu0 0.0
        %1664 = vmatprep.subr.mxu0 0.0
        %1665 = vmatpush1.msra.mxu0 0.0
        %1666 = vmatprep.subr.mxu0 0.0
        %1667 = vmatpush1.msra.mxu0 0.0
        %1668 = vmatprep.subr.mxu0 0.0
        %1669 = vmatpush1.msra.mxu0 0.0
        %1670 = vmatprep.subr.mxu0 0.0
        %1671 = vmatpush1.msra.mxu0 0.0
        %1672 = vmatprep.subr.mxu0 0.0
        %1673 = vmatpush1.msra.mxu0 %v1640
        %1674 = vmatprep.subr.mxu0 0.0
        %1675 = vmatpush2.msra.mxu0 0.0
        %1676 = vmatprep.subr.mxu0 0.0
        %1677 = vmatpush2.msra.mxu0 0.0
        %1678 = vmatprep.subr.mxu0 0.0
        %1679 = vmatpush2.msra.mxu0 0.0
        %1680 = vmatprep.subr.mxu0 0.0
        %1681 = vmatpush2.msra.mxu0 0.0
        %1682 = vmatprep.subr.mxu0 0.0
        %1683 = vmatpush2.msra.mxu0 0.0
        %1684 = vmatprep.subr.mxu0 0.0
        %1685 = vmatpush2.msra.mxu0 0.0
        %1686 = vmatprep.subr.mxu0 0.0
        %1687 = vmatpush2.msra.mxu0 0.0
        %1688 = vmatprep.subr.mxu0 0.0
        %1689 = vmatpush2.msra.mxu0 0.0
        %1690 = vmatprep.subr.mxu0 0.0
        %1691 = vmatpush2.msra.mxu0 0.0
        %1692 = vmatprep.subr.mxu0 0.0
        %1693 = vmatpush2.msra.mxu0 0.0
        %1694 = vmatprep.subr.mxu0 0.0
        %1695 = vmatpush2.msra.mxu0 0.0
        %1696 = vmatprep.subr.mxu0 0.0
        %1697 = vmatpush2.msra.mxu0 0.0
        %1698 = vmatprep.subr.mxu0 0.0
        %1699 = vmatpush2.msra.mxu0 0.0
        %1700 = vmatprep.subr.mxu0 0.0
        %1701 = vmatpush2.msra.mxu0 0.0
        %1702 = vmatprep.subr.mxu0 0.0
        %1703 = vmatpush2.msra.mxu0 0.0
        %1704 = vmatprep.subr.mxu0 0.0
        %1705 = vmatpush2.msra.mxu0 0.0
        %1706 = vmatprep.mubr.f32.mxu0 0.0
        %1707 = vmatmul.mubr.f32.gmra.mxu0 %v1628
        %v1708 = vpop.f32.mrf.mxu0
        %v1709 = vadd.f32 0.0, %v1708
        %v1710 = vpop.f32.mrf.mxu0
        %1711 = vmatprep.mubr.f32.mxu0 0.0
        %1712 = vmatmul.mubr.f32.gmra.mxu0 %v1631
        %v1713 = vpop.f32.mrf.mxu0
        %v1714 = vadd.f32 0.0, %v1713
        %v1715 = vpop.f32.mrf.mxu0
        %1716 = vmatprep.mubr.f32.mxu0 0.0
        %1717 = vmatmul.mubr.f32.gmra.mxu0 %v1634
        %v1718 = vpop.f32.mrf.mxu0
        %v1719 = vadd.f32 0.0, %v1718
        %v1720 = vpop.f32.mrf.mxu0
        %1721 = vmatprep.mubr.f32.mxu0 0.0
        %1722 = vmatmul.mubr.f32.gmra.mxu0 %v1637
        %v1723 = vpop.f32.mrf.mxu0
        %v1724 = vadd.f32 0.0, %v1723
        %v1725 = vpop.f32.mrf.mxu0
        %1726 = vdwg.mxu0
        %v1727 = vmul.f32 %v1381, %v1709
        %v1728 = vmul.f32 %v1382, %v1714
        %v1729 = vmul.f32 %v1383, %v1719
        %v1730 = vmul.f32 %v1384, %v1724
        %v1731 = vadd.f32 %v1727, %v1025
        %v1732 = vadd.f32 %v1728, %v1026
        %v1733 = vadd.f32 %v1729, %v1027
        %v1734 = vadd.f32 %v1730, %v1028
        %v1735 = vmax.f32 %v1731, 0.0
        %v1736 = vmax.f32 %v1732, 0.0
        %v1737 = vmax.f32 %v1733, 0.0
        %v1738 = vmax.f32 %v1734, 0.0
        %v1739 = vmin.f32 %v1735, 6.0
        %v1740 = vmin.f32 %v1736, 6.0
        %v1741 = vmin.f32 %v1737, 6.0
        %v1742 = vmin.f32 %v1738, 6.0
        %1743 = vst.msk [vmem:[%s487] sm:$0xff] %vm1062, %v1739
        %1744 = vst.msk [vmem:[%s487 + $0x8] sm:$0xff] %vm1062, %v1740
        %1745 = vst.msk [vmem:[%s487 + $0x10] sm:$0xff] %vm1062, %v1741
        %1746 = vst.msk [vmem:[%s487 + $0x18] sm:$0xff] %vm1062, %v1742
        %s1747 = sand.u32 %s337, 1
        %s1748 = scalar_lea.sflag [#allocation4], %s1747
        %s1749 = sand.u32 %s337, 1
        %s1750 = smul.addr %s1749, 32
        %s1751 = scalar_lea.vmem [#allocation7], %s1750
        // Predicated region
        $region85: #{se_resnet1d_basic_dec_block.1} parent=75 // pred_check
          %p1752 = pneg %p347
        $region86: #{se_resnet1d_basic_dec_block.1} parent=75 // pred_check_branch
          %1754 = sbr.rel (%p1752) target = $region88
        $region87: #{se_resnet1d_basic_dec_block.1} parent=75 // pred_region
          %s1755 = smul.u32 4, %s30
          %s1757 = ssub.s32 512, 512
          %1758 = vsyncadd %s1748, %s1757
          %s1759 = smul.addr %s1755, 128
          %s1760 = scalar_lea.hbm %s14, %s1759
          %s1761 = sshll.u32 %s1751, 4
          %s1762 = int_to_ptr.vmem [resolvable:$true] %s1761
          %1767 = dma.vmem_to_hbm [thread:$0]  %s1762, 512, %s1760, %s1748, 128, 128, 8
        $region88: #{se_resnet1d_basic_dec_block.1} parent=75 // pred_fallthru
          _
      $region76: #{se_resnet1d_basic_dec_block.1} parent=5 // pred_fallthru
        _
      %p1768 = scmp.le.s32.totalorder 2, %s25
      // Predicated region
      $region89: #{se_resnet1d_basic_dec_block.1} parent=5 // pred_check
        %p1769 = pneg %p1768
      $region90: #{se_resnet1d_basic_dec_block.1} parent=5 // pred_check_branch
        %1771 = sbr.rel (%p1769) target = $region92
      $region91: #{se_resnet1d_basic_dec_block.1} parent=5 // pred_region
        %s1772 = ssub.s32 %s25, 2
        // Predicated region
        $region93: #{se_resnet1d_basic_dec_block.1} parent=91 // pred_check
          %p1773 = pneg %p353
        $region94: #{se_resnet1d_basic_dec_block.1} parent=91 // pred_check_branch
          %1775 = sbr.rel (%p1773) target = $region96
        $region95: #{se_resnet1d_basic_dec_block.1} parent=91 // pred_region
          %s1776 = sand.u32 %s338, 1
          %s1777 = scalar_lea.sflag [#allocation4], %s1776
          %s1778 = sand.u32 %s338, 1
          %s1779 = smul.addr %s1778, 32
          %s1780 = scalar_lea.vmem [#allocation7], %s1779
          %1781 = dma.done %s1777, 512
        $region96: #{se_resnet1d_basic_dec_block.1} parent=91 // pred_fallthru
          _
      $region92: #{se_resnet1d_basic_dec_block.1} parent=5 // pred_fallthru
        _
    $region6: #{se_resnet1d_basic_dec_block.1} parent=1 // loop_footer
      %s29 = sadd.s32 1, %s25
    $region7: #{se_resnet1d_basic_dec_block.1} parent=1 // loop_footer_branch
      %24 = sbr.rel target = $region3
    $region8: #{se_resnet1d_basic_dec_block.1} parent=1 // loop_exit
      _
    %1782 = vsyncpa [#allocation3], 1
    %s1783 = scalar_lea.sflag [#allocation3], 1
    %1784 = vsyncpa %s1783, 1
    %1785 = vsyncpa [#allocation6], 1
    %1786 = vsyncpa [#allocation4], 1
    %s1787 = scalar_lea.sflag [#allocation4], 1
    %1788 = vsyncpa %s1787, 1

</llo_original>
